<compile_context>
chip_gen: v5e
topology: v5e:2x2
jax: 0.10.0
libtpu: 0.0.40
codegen_flags: <defaults>
</compile_context>

<pallas_src>
import functools
import math

import jax
import jax.numpy as jnp
from jax.experimental import pallas as pl
from jax.experimental.pallas import tpu as pltpu


# --------------------------------------------------------------------------
# Utilities
# --------------------------------------------------------------------------
@functools.lru_cache(maxsize=None)
def _vmem_limit_bytes() -> int:
    """Generation-aware VMEM budget: ~3/4 of physical, capped at 100 MiB."""
    try:
        info = pltpu.get_tpu_info()
        cap = getattr(info, "vmem_capacity_bytes", None)
        if cap:
            return int(min(cap * 3 // 4, 100 * 1024 * 1024))
    except Exception:
        pass
    return 48 * 1024 * 1024  # safe on v5e/v6e (128 MiB) and v7x (64 MiB)


def _compiler_params(dim_sem):
    return pltpu.CompilerParams(dimension_semantics=dim_sem,
                                vmem_limit_bytes=_vmem_limit_bytes())


def _pick_row_tile(dim: int, preferred: int = 256) -> int:
    """Largest multiple-of-8 divisor of dim that is <= preferred, else full dim."""
    if dim <= preferred:
        return dim
    t = (preferred // 8) * 8
    while t >= 8:
        if dim % t == 0:
            return t
        t -= 8
    return dim


def _pick_lane_tile(dim: int, preferred: int = 512) -> int:
    """Largest multiple-of-128 divisor of dim that is <= preferred, else full dim."""
    if dim <= preferred:
        return dim
    t = (preferred // 128) * 128
    while t >= 128:
        if dim % t == 0:
            return t
        t -= 128
    return dim


def _layer_norm_rows(h_f32, w, b, eps):
    """LayerNorm over the last (lane) axis; h_f32 is (rows, C) float32."""
    mu = jnp.mean(h_f32, axis=-1, keepdims=True)
    hc = h_f32 - mu
    var = jnp.mean(hc * hc, axis=-1, keepdims=True)
    return hc * jax.lax.rsqrt(var + eps) * w + b


# --------------------------------------------------------------------------
# Kernel 1: QKV projection  y = x @ W_qkv + b_qkv  (weight stays VMEM-resident)
# --------------------------------------------------------------------------
def _linear_kernel(x_ref, w_ref, b_ref, o_ref, *, compute_dtype):
    y = jnp.dot(x_ref[...].astype(compute_dtype), w_ref[...],
                preferred_element_type=jnp.float32)
    o_ref[...] = (y + b_ref[...]).astype(o_ref.dtype)


def _linear(x, w, b, *, out_dtype, compute_dtype, tm_pref=256):
    M, K = x.shape
    N = w.shape[1]
    tm = _pick_row_tile(M, tm_pref)
    return pl.pallas_call(
        functools.partial(_linear_kernel, compute_dtype=compute_dtype),
        out_shape=jax.ShapeDtypeStruct((M, N), out_dtype),
        grid=(M // tm,),
        in_specs=[pl.BlockSpec((tm, K), lambda i: (i, 0)),
                  pl.BlockSpec((K, N), lambda i: (0, 0)),   # constant index -> no re-streaming
                  pl.BlockSpec((1, N), lambda i: (0, 0))],
        out_specs=pl.BlockSpec((tm, N), lambda i: (i, 0)),
        compiler_params=_compiler_params(("parallel",)),
    )(x, w, b)


# --------------------------------------------------------------------------
# Kernel 2: attention per batch element (all heads), softmax scale pre-folded
# into W_q, deferred 1/l normalization via the EUP reciprocal.
# --------------------------------------------------------------------------
def _attention_kernel(qkv_ref, o_ref):
    # qkv_ref: (T, 1, 3, H, Dh) in compute dtype.  o_ref: (T, 1, H, Dh).
    H = qkv_ref.shape[3]
    for h in range(H):                               # static unroll over heads
        q = qkv_ref[:, 0, 0, h, :]                   # (T, Dh), already scaled
        k = qkv_ref[:, 0, 1, h, :]
        v = qkv_ref[:, 0, 2, h, :]
        s = jax.lax.dot_general(q, k, (((1,), (1,)), ((), ())),
                                preferred_element_type=jnp.float32)      # (T, T)
        m = jnp.max(s, axis=-1, keepdims=True)
        p = jnp.exp(s - m)
        l = jnp.sum(p, axis=-1, keepdims=True)
        o = jnp.dot(p.astype(v.dtype), v, preferred_element_type=jnp.float32)
        o = o * pl.reciprocal(l, approx=True)        # deferred softmax denominator
        o_ref[:, 0, h, :] = o.astype(o_ref.dtype)


def _attention(qkv5, *, out_dtype):
    T, B, _, H, Dh = qkv5.shape
    return pl.pallas_call(
        _attention_kernel,
        out_shape=jax.ShapeDtypeStruct((T, B, H, Dh), out_dtype),
        grid=(B,),
        in_specs=[pl.BlockSpec((T, 1, 3, H, Dh), lambda b: (0, b, 0, 0, 0))],
        out_specs=pl.BlockSpec((T, 1, H, Dh), lambda b: (0, b, 0, 0)),
        compiler_params=_compiler_params(("parallel",)),
    )(qkv5)


# --------------------------------------------------------------------------
# Kernel 3: attention output projection + residual + LayerNorm (gamma_1 folded
# into W_o / b_o), weight VMEM-resident.
# --------------------------------------------------------------------------
def _attn_out_kernel(attn_ref, res_ref, w_ref, b_ref, lnw_ref, lnb_ref, o_ref, *, eps):
    y = jnp.dot(attn_ref[...], w_ref[...], preferred_element_type=jnp.float32)
    h = res_ref[...].astype(jnp.float32) + y + b_ref[...]
    o_ref[...] = _layer_norm_rows(h, lnw_ref[...], lnb_ref[...], eps).astype(o_ref.dtype)


def _attn_out_block(attn, residual, w_o, b_o, ln_w, ln_b, *, eps, out_dtype, tm_pref=256):
    M, C = attn.shape
    tm = _pick_row_tile(M, tm_pref)
    row = pl.BlockSpec((tm, C), lambda i: (i, 0))
    vec = pl.BlockSpec((1, C), lambda i: (0, 0))
    return pl.pallas_call(
        functools.partial(_attn_out_kernel, eps=eps),
        out_shape=jax.ShapeDtypeStruct((M, C), out_dtype),
        grid=(M // tm,),
        in_specs=[row, row,
                  pl.BlockSpec((C, C), lambda i: (0, 0)),   # W_o resident
                  vec, vec, vec],
        out_specs=row,
        compiler_params=_compiler_params(("parallel",)),
    )(attn, residual, w_o, b_o, ln_w, ln_b)


# --------------------------------------------------------------------------
# Kernel 4: FFN (+ residual + LayerNorm), hidden dim F tiled on an "arbitrary"
# grid axis with an f32 VMEM accumulator; gamma_2 folded into W_fc2 / b_fc2.
# --------------------------------------------------------------------------
def _ffn_kernel(x_ref, w1_ref, b1_ref, w2_ref, b2_ref, lnw_ref, lnb_ref, o_ref,
                acc_ref, *, eps, compute_dtype):
    f = pl.program_id(1)

    @pl.when(f == 0)
    def _():
        acc_ref[...] = jnp.zeros_like(acc_ref)

    x = x_ref[...]
    h = jnp.dot(x.astype(compute_dtype), w1_ref[...],
                preferred_element_type=jnp.float32)
    h = jnp.maximum(h + b1_ref[...], 0.0)
    acc_ref[...] += jnp.dot(h.astype(compute_dtype), w2_ref[...],
                            preferred_element_type=jnp.float32)

    @pl.when(f == pl.num_programs(1) - 1)
    def _():
        z = x.astype(jnp.float32) + acc_ref[...] + b2_ref[...]
        o_ref[...] = _layer_norm_rows(z, lnw_ref[...], lnb_ref[...], eps).astype(o_ref.dtype)


def _ffn_block(x, w1, b1, w2, b2, ln_w, ln_b, *, eps, compute_dtype, out_dtype,
               tm_pref=256, tf_pref=512):
    M, C = x.shape
    F = w1.shape[1]
    tm = _pick_row_tile(M, tm_pref)
    tf = _pick_lane_tile(F, tf_pref)
    row = pl.BlockSpec((tm, C), lambda i, f: (i, 0))
    vec_c = pl.BlockSpec((1, C), lambda i, f: (0, 0))
    return pl.pallas_call(
        functools.partial(_ffn_kernel, eps=eps, compute_dtype=compute_dtype),
        out_shape=jax.ShapeDtypeStruct((M, C), out_dtype),
        grid=(M // tm, F // tf),
        in_specs=[row,
                  pl.BlockSpec((C, tf), lambda i, f: (0, f)),
                  pl.BlockSpec((1, tf), lambda i, f: (0, f)),
                  pl.BlockSpec((tf, C), lambda i, f: (f, 0)),
                  vec_c, vec_c, vec_c],
        out_specs=row,
        scratch_shapes=[pltpu.VMEM((tm, C), jnp.float32)],
        compiler_params=_compiler_params(("parallel", "arbitrary")),
    )(x, w1, b1, w2, b2, ln_w, ln_b)


# --------------------------------------------------------------------------
# Layer forward (eval mode, post-norm / encoder_normalize_before=False)
# --------------------------------------------------------------------------
@functools.partial(jax.jit, static_argnames=("num_heads", "ln_eps", "compute_dtype"))
def transformer_sentence_encoder_layer_forward(x, prepared, *, num_heads,
                                               ln_eps=1e-5,
                                               compute_dtype=jnp.bfloat16):
    T, B, C = x.shape
    H = num_heads
    Dh = C // H
    M = T * B

    x2 = x.reshape(M, C)

    # 1) fused QKV projection; softmax scale and gammas are pre-folded into weights.
    qkv = _linear(x2, prepared["w_qkv"], prepared["b_qkv"],
                  out_dtype=compute_dtype, compute_dtype=compute_dtype)      # (M, 3C)

    # 2) attention: all reshapes below are contiguous (free), no HBM transposes.
    qkv5 = qkv.reshape(T, B, 3, H, Dh)
    attn = _attention(qkv5, out_dtype=compute_dtype)                         # (T, B, H, Dh)
    attn2 = attn.reshape(M, C)

    # 3) output projection + residual + LayerNorm.
    x2 = _attn_out_block(attn2, x2, prepared["w_o"], prepared["b_o"],
                         prepared["ln1_w"], prepared["ln1_b"],
                         eps=ln_eps, out_dtype=x.dtype)

    # 4) FFN + residual + LayerNorm.
    out = _ffn_block(x2, prepared["w_fc1"], prepared["b_fc1"],
                     prepared["w_fc2"], prepared["b_fc2"],
                     prepared["ln2_w"], prepared["ln2_b"],
                     eps=ln_eps, compute_dtype=compute_dtype, out_dtype=x.dtype)
    return out.reshape(T, B, C)


# --------------------------------------------------------------------------
# Parameters
# --------------------------------------------------------------------------
def init_params(key, embed_dim, ffn_dim, init_values=0.0, dtype=jnp.float32):
    C, F = embed_dim, ffn_dim
    ks = jax.random.split(key, 12)

    def w(k, shape):
        return (0.02 * jax.random.normal(k, shape)).astype(dtype)

    params = {
        "w_q": w(ks[0], (C, C)), "b_q": w(ks[1], (C,)),
        "w_k": w(ks[2], (C, C)), "b_k": w(ks[3], (C,)),
        "w_v": w(ks[4], (C, C)), "b_v": w(ks[5], (C,)),
        "w_o": w(ks[6], (C, C)), "b_o": w(ks[7], (C,)),
        "w_fc1": w(ks[8], (C, F)), "b_fc1": w(ks[9], (F,)),
        "w_fc2": w(ks[10], (F, C)), "b_fc2": w(ks[11], (C,)),
        "ln1_w": jnp.ones((C,), dtype), "ln1_b": jnp.zeros((C,), dtype),
        "ln2_w": jnp.ones((C,), dtype), "ln2_b": jnp.zeros((C,), dtype),
        "gamma_1": None, "gamma_2": None,
    }
    if init_values > 0.0:
        params["gamma_1"] = init_values * jnp.ones((C,), dtype)
        params["gamma_2"] = init_values * jnp.ones((C,), dtype)
    return params


def prepare_params(params, *, num_heads, attn_scale_factor=1.0,
                   compute_dtype=jnp.bfloat16):
    """One-time weight prep: QKV concat, bf16 cast, scale/gamma folding."""
    f32 = jnp.float32
    C = params["w_q"].shape[0]
    F = params["w_fc1"].shape[1]
    Dh = C // num_heads
    scaling = 1.0 / math.sqrt(Dh * attn_scale_factor)

    g1 = params.get("gamma_1")
    g1 = jnp.ones((C,), f32) if g1 is None else g1.astype(f32)
    g2 = params.get("gamma_2")
    g2 = jnp.ones((C,), f32) if g2 is None else g2.astype(f32)

    w_qkv = jnp.concatenate([params["w_q"].astype(f32) * scaling,
                             params["w_k"].astype(f32),
                             params["w_v"].astype(f32)], axis=1)
    b_qkv = jnp.concatenate([params["b_q"].astype(f32) * scaling,
                             params["b_k"].astype(f32),
                             params["b_v"].astype(f32)], axis=0)

    return {
        "w_qkv": w_qkv.astype(compute_dtype),
        "b_qkv": b_qkv.reshape(1, 3 * C),
        "w_o": (params["w_o"].astype(f32) * g1[None, :]).astype(compute_dtype),
        "b_o": (params["b_o"].astype(f32) * g1).reshape(1, C),
        "ln1_w": params["ln1_w"].astype(f32).reshape(1, C),
        "ln1_b": params["ln1_b"].astype(f32).reshape(1, C),
        "w_fc1": params["w_fc1"].astype(compute_dtype),
        "b_fc1": params["b_fc1"].astype(f32).reshape(1, F),
        "w_fc2": (params["w_fc2"].astype(f32) * g2[None, :]).astype(compute_dtype),
        "b_fc2": (params["b_fc2"].astype(f32) * g2).reshape(1, C),
        "ln2_w": params["ln2_w"].astype(f32).reshape(1, C),
        "ln2_b": params["ln2_b"].astype(f32).reshape(1, C),
    }


class TransformerSentenceEncoderLayer:
    """JAX/Pallas mirror of the PyTorch module (eval-mode, post-norm forward)."""

    def __init__(self, embedding_dim=768, ffn_embedding_dim=3072,
                 num_attention_heads=8, attn_scale_factor=1,
                 encoder_normalize_before=False, init_values=0.0,
                 key=None, dtype=jnp.float32, compute_dtype=jnp.bfloat16):
        assert not encoder_normalize_before, "TODO(synk): pre-norm path not implemented"
        assert embedding_dim % num_attention_heads == 0
        self.embedding_dim = embedding_dim
        self.num_heads = num_attention_heads
        self.attn_scale_factor = attn_scale_factor
        self.compute_dtype = compute_dtype
        key = jax.random.PRNGKey(0) if key is None else key
        self.params = init_params(key, embedding_dim, ffn_embedding_dim,
                                  init_values=init_values, dtype=dtype)
        self.prepared = prepare_params(self.params, num_heads=num_attention_heads,
                                       attn_scale_factor=attn_scale_factor,
                                       compute_dtype=compute_dtype)

    def __call__(self, x):
        return transformer_sentence_encoder_layer_forward(
            x, self.prepared, num_heads=self.num_heads,
            compute_dtype=self.compute_dtype)


# --------------------------------------------------------------------------
# Pure-JAX reference (eval mode, post-norm) for correctness checking.
# --------------------------------------------------------------------------
def reference_forward(x, params, *, num_heads, attn_scale_factor=1.0, ln_eps=1e-5):
    T, B, C = x.shape
    H = num_heads
    Dh = C // H
    M = T * B
    scaling = 1.0 / math.sqrt(Dh * attn_scale_factor)
    hi = jax.lax.Precision.HIGHEST
    mm = lambda a, b: jnp.matmul(a, b, precision=hi)

    def ln(h, w, b):
        mu = jnp.mean(h, -1, keepdims=True)
        var = jnp.mean((h - mu) ** 2, -1, keepdims=True)
        return (h - mu) * jax.lax.rsqrt(var + ln_eps) * w + b

    x2 = x.reshape(M, C).astype(jnp.float32)
    residual = x2
    q = (mm(x2, params["w_q"]) + params["b_q"]).reshape(T, B, H, Dh).transpose(1, 2, 0, 3)
    k = (mm(x2, params["w_k"]) + params["b_k"]).reshape(T, B, H, Dh).transpose(1, 2, 0, 3)
    v = (mm(x2, params["w_v"]) + params["b_v"]).reshape(T, B, H, Dh).transpose(1, 2, 0, 3)
    s = jnp.einsum("bhtd,bhsd->bhts", q, k, precision=hi) * scaling
    a = jax.nn.softmax(s, axis=-1)
    o = jnp.einsum("bhts,bhsd->bhtd", a, v, precision=hi)
    o = o.transpose(2, 0, 1, 3).reshape(M, C)
    attn_out = mm(o, params["w_o"]) + params["b_o"]

    g1 = params.get("gamma_1")
    g1 = 1.0 if g1 is None else g1
    h = ln(residual + g1 * attn_out, params["ln1_w"], params["ln1_b"])

    f = jnp.maximum(mm(h, params["w_fc1"]) + params["b_fc1"], 0.0)
    f = mm(f, params["w_fc2"]) + params["b_fc2"]
    g2 = params.get("gamma_2")
    g2 = 1.0 if g2 is None else g2
    out = ln(h + g2 * f, params["ln2_w"], params["ln2_b"])
    return out.reshape(T, B, C).astype(x.dtype)


if __name__ == "__main__":
    key = jax.random.PRNGKey(0)
    kx, kp = jax.random.split(key)

    # Small shapes consistent with the module: (seq, batch, embed) = (8, 2, 32),
    # 4 attention heads, FFN dim 64.
    T, B, C, H, F = 8, 2, 32, 4, 64
    x = jax.random.normal(kx, (T, B, C), dtype=jnp.float32)

    layer = TransformerSentenceEncoderLayer(
        embedding_dim=C, ffn_embedding_dim=F, num_attention_heads=H, key=kp)

    y = jax.block_until_ready(layer(x))

    y_ref = reference_forward(x, layer.params, num_heads=H)
    assert y.shape == x.shape and y.dtype == x.dtype
    max_err = float(jnp.max(jnp.abs(y - y_ref)))
    assert max_err < 3e-2, f"mismatch vs reference: max|err|={max_err}"

    print("KERNEL_OK")
</pallas_src>

<mosaic_0001>
module attributes {stable_mosaic.version = 11 : i64} {
  func.func @_linear_kernel(%arg0: i32, %arg1: memref<16x32xf32, #tpu.memory_space<vmem>>, %arg2: memref<32x96xbf16, #tpu.memory_space<vmem>>, %arg3: memref<1x96xf32, #tpu.memory_space<vmem>>, %arg4: memref<16x96xbf16, #tpu.memory_space<vmem>>) attributes {dimension_semantics = [#tpu.dimension_semantics<parallel>], iteration_bounds = array<i64: 1>, scalar_prefetch = 0 : i64, scratch_operands = 0 : i64, tpu.core_type = #tpu.core_type<tc>, window_params = [{transform_indices = @transform_0, window_bounds = array<i64: 16, 32>}, {pipeline_mode = #tpu.pipeline_mode<synchronous>, transform_indices = @transform_1, window_bounds = array<i64: 32, 96>}, {pipeline_mode = #tpu.pipeline_mode<synchronous>, transform_indices = @transform_2, window_bounds = array<i64: 1, 96>}, {transform_indices = @transform_3, window_bounds = array<i64: 16, 96>}]} {
    %c0 = arith.constant 0 : index
    %c0_0 = arith.constant 0 : index
    %0 = vector.load %arg1[%c0, %c0_0] : memref<16x32xf32, #tpu.memory_space<vmem>>, vector<16x32xf32>
    %1 = arith.truncf %0 : vector<16x32xf32> to vector<16x32xbf16>
    %c0_1 = arith.constant 0 : index
    %c0_2 = arith.constant 0 : index
    %2 = vector.load %arg2[%c0_1, %c0_2] : memref<32x96xbf16, #tpu.memory_space<vmem>>, vector<32x96xbf16>
    %cst = arith.constant dense<0.000000e+00> : vector<16x96xf32>
    %3 = tpu.matmul %1, %2, %cst {dimension_numbers = #tpu.dot_dimension_numbers<[1], [0], [0], [1], [0, 0, 1, 1], [], []>} : vector<16x32xbf16>, vector<32x96xbf16>, vector<16x96xf32> -> vector<16x96xf32>
    %c0_3 = arith.constant 0 : index
    %c0_4 = arith.constant 0 : index
    %4 = vector.load %arg3[%c0_3, %c0_4] : memref<1x96xf32, #tpu.memory_space<vmem>>, vector<1x96xf32>
    %5 = vector.broadcast %4 : vector<1x96xf32> to vector<16x96xf32>
    %6 = arith.addf %3, %5 : vector<16x96xf32>
    %7 = arith.truncf %6 : vector<16x96xf32> to vector<16x96xbf16>
    %c0_5 = arith.constant 0 : index
    %c0_6 = arith.constant 0 : index
    %8 = vector.load %arg4[%c0_5, %c0_6] : memref<16x96xbf16, #tpu.memory_space<vmem>>, vector<16x96xbf16>
    tpu.vector_store %arg4[%c0_5, %c0_6], %7 {strides = array<i32>} : memref<16x96xbf16, #tpu.memory_space<vmem>>, vector<16x96xbf16>,
    return
  }
  func.func @transform_0(%arg0: i32) -> (i32, i32) {
    %c0_i32 = arith.constant 0 : i32
    %c0_i32_0 = arith.constant 0 : i32
    return %arg0, %c0_i32 : i32, i32
  }
  func.func @transform_1(%arg0: i32) -> (i32, i32) {
    %c0_i32 = arith.constant 0 : i32
    %c0_i32_0 = arith.constant 0 : i32
    %c0_i32_1 = arith.constant 0 : i32
    return %c0_i32, %c0_i32_0 : i32, i32
  }
  func.func @transform_2(%arg0: i32) -> (i32, i32) {
    %c0_i32 = arith.constant 0 : i32
    %c0_i32_0 = arith.constant 0 : i32
    %c0_i32_1 = arith.constant 0 : i32
    return %c0_i32, %c0_i32_0 : i32, i32
  }
  func.func @transform_3(%arg0: i32) -> (i32, i32) {
    %c0_i32 = arith.constant 0 : i32
    %c0_i32_0 = arith.constant 0 : i32
    return %arg0, %c0_i32 : i32, i32
  }
}

module attributes {stable_mosaic.version = 11 : i64} {
  func.func @_attention_kernel(%arg0: i32, %arg1: memref<8x1x3x4x8xbf16, #tpu.memory_space<vmem>>, %arg2: memref<8x1x4x8xbf16, #tpu.memory_space<vmem>>) attributes {dimension_semantics = [#tpu.dimension_semantics<parallel>], iteration_bounds = array<i64: 2>, scalar_prefetch = 0 : i64, scratch_operands = 0 : i64, tpu.core_type = #tpu.core_type<tc>, window_params = [{transform_indices = @transform_0, window_bounds = array<i64: 8, 1, 3, 4, 8>}, {transform_indices = @transform_1, window_bounds = array<i64: 8, 1, 4, 8>}]} {
    %c0 = arith.constant 0 : index
    %c0_0 = arith.constant 0 : index
    %c0_1 = arith.constant 0 : index
    %c0_2 = arith.constant 0 : index
    %c0_3 = arith.constant 0 : index
    %0 = vector.load %arg1[%c0, %c0_0, %c0_1, %c0_2, %c0_3] : memref<8x1x3x4x8xbf16, #tpu.memory_space<vmem>>, vector<8x1x1x1x8xbf16>
    %1 = vector.shape_cast %0 : vector<8x1x1x1x8xbf16> to vector<8x8xbf16>
    %c0_4 = arith.constant 0 : index
    %c0_5 = arith.constant 0 : index
    %c1 = arith.constant 1 : index
    %c0_6 = arith.constant 0 : index
    %c0_7 = arith.constant 0 : index
    %2 = vector.load %arg1[%c0_4, %c0_5, %c1, %c0_6, %c0_7] : memref<8x1x3x4x8xbf16, #tpu.memory_space<vmem>>, vector<8x1x1x1x8xbf16>
    %3 = vector.shape_cast %2 : vector<8x1x1x1x8xbf16> to vector<8x8xbf16>
    %c0_8 = arith.constant 0 : index
    %c0_9 = arith.constant 0 : index
    %c2 = arith.constant 2 : index
    %c0_10 = arith.constant 0 : index
    %c0_11 = arith.constant 0 : index
    %4 = vector.load %arg1[%c0_8, %c0_9, %c2, %c0_10, %c0_11] : memref<8x1x3x4x8xbf16, #tpu.memory_space<vmem>>, vector<8x1x1x1x8xbf16>
    %5 = vector.shape_cast %4 : vector<8x1x1x1x8xbf16> to vector<8x8xbf16>
    %cst = arith.constant dense<0.000000e+00> : vector<8x8xf32>
    %6 = tpu.matmul %1, %3, %cst {dimension_numbers = #tpu.dot_dimension_numbers<[1], [1], [0], [0], [0, 0, 1, 0], [], []>} : vector<8x8xbf16>, vector<8x8xbf16>, vector<8x8xf32> -> vector<8x8xf32>
    %cst_12 = arith.constant dense<0xFF800000> : vector<8xf32>
    %7 = vector.multi_reduction <maximumf>, %6, %cst_12 [1] : vector<8x8xf32> to vector<8xf32>
    %8 = vector.shape_cast %7 : vector<8xf32> to vector<8x1xf32>
    %9 = vector.broadcast %8 : vector<8x1xf32> to vector<8x8xf32>
    %10 = arith.subf %6, %9 : vector<8x8xf32>
    %11 = math.exp %10 : vector<8x8xf32>
    %cst_13 = arith.constant dense<0.000000e+00> : vector<8xf32>
    %12 = vector.multi_reduction <add>, %11, %cst_13 [1] : vector<8x8xf32> to vector<8xf32>
    %13 = vector.shape_cast %12 : vector<8xf32> to vector<8x1xf32>
    %14 = arith.truncf %11 : vector<8x8xf32> to vector<8x8xbf16>
    %cst_14 = arith.constant dense<0.000000e+00> : vector<8x8xf32>
    %15 = tpu.matmul %14, %5, %cst_14 {dimension_numbers = #tpu.dot_dimension_numbers<[1], [0], [0], [1], [0, 0, 1, 1], [], []>} : vector<8x8xbf16>, vector<8x8xbf16>, vector<8x8xf32> -> vector<8x8xf32>
    %16 = tpu.reciprocal %13 {approx = true} : vector<8x1xf32> -> vector<8x1xf32>
    %17 = vector.broadcast %16 : vector<8x1xf32> to vector<8x8xf32>
    %18 = arith.mulf %15, %17 : vector<8x8xf32>
    %19 = arith.truncf %18 : vector<8x8xf32> to vector<8x8xbf16>
    %c0_15 = arith.constant 0 : index
    %c0_16 = arith.constant 0 : index
    %c0_17 = arith.constant 0 : index
    %c0_18 = arith.constant 0 : index
    %20 = vector.load %arg2[%c0_15, %c0_16, %c0_17, %c0_18] : memref<8x1x4x8xbf16, #tpu.memory_space<vmem>>, vector<8x1x1x8xbf16>
    %21 = vector.shape_cast %20 : vector<8x1x1x8xbf16> to vector<8x8xbf16>
    %22 = vector.shape_cast %19 : vector<8x8xbf16> to vector<8x1x1x8xbf16>
    tpu.vector_store %arg2[%c0_15, %c0_16, %c0_17, %c0_18], %22 {strides = array<i32>} : memref<8x1x4x8xbf16, #tpu.memory_space<vmem>>, vector<8x1x1x8xbf16>,
    %c0_19 = arith.constant 0 : index
    %c0_20 = arith.constant 0 : index
    %c0_21 = arith.constant 0 : index
    %c1_22 = arith.constant 1 : index
    %c0_23 = arith.constant 0 : index
    %23 = vector.load %arg1[%c0_19, %c0_20, %c0_21, %c1_22, %c0_23] : memref<8x1x3x4x8xbf16, #tpu.memory_space<vmem>>, vector<8x1x1x1x8xbf16>
    %24 = vector.shape_cast %23 : vector<8x1x1x1x8xbf16> to vector<8x8xbf16>
    %c0_24 = arith.constant 0 : index
    %c0_25 = arith.constant 0 : index
    %c1_26 = arith.constant 1 : index
    %c1_27 = arith.constant 1 : index
    %c0_28 = arith.constant 0 : index
    %25 = vector.load %arg1[%c0_24, %c0_25, %c1_26, %c1_27, %c0_28] : memref<8x1x3x4x8xbf16, #tpu.memory_space<vmem>>, vector<8x1x1x1x8xbf16>
    %26 = vector.shape_cast %25 : vector<8x1x1x1x8xbf16> to vector<8x8xbf16>
    %c0_29 = arith.constant 0 : index
    %c0_30 = arith.constant 0 : index
    %c2_31 = arith.constant 2 : index
    %c1_32 = arith.constant 1 : index
    %c0_33 = arith.constant 0 : index
    %27 = vector.load %arg1[%c0_29, %c0_30, %c2_31, %c1_32, %c0_33] : memref<8x1x3x4x8xbf16, #tpu.memory_space<vmem>>, vector<8x1x1x1x8xbf16>
    %28 = vector.shape_cast %27 : vector<8x1x1x1x8xbf16> to vector<8x8xbf16>
    %cst_34 = arith.constant dense<0.000000e+00> : vector<8x8xf32>
    %29 = tpu.matmul %24, %26, %cst_34 {dimension_numbers = #tpu.dot_dimension_numbers<[1], [1], [0], [0], [0, 0, 1, 0], [], []>} : vector<8x8xbf16>, vector<8x8xbf16>, vector<8x8xf32> -> vector<8x8xf32>
    %cst_35 = arith.constant dense<0xFF800000> : vector<8xf32>
    %30 = vector.multi_reduction <maximumf>, %29, %cst_35 [1] : vector<8x8xf32> to vector<8xf32>
    %31 = vector.shape_cast %30 : vector<8xf32> to vector<8x1xf32>
    %32 = vector.broadcast %31 : vector<8x1xf32> to vector<8x8xf32>
    %33 = arith.subf %29, %32 : vector<8x8xf32>
    %34 = math.exp %33 : vector<8x8xf32>
    %cst_36 = arith.constant dense<0.000000e+00> : vector<8xf32>
    %35 = vector.multi_reduction <add>, %34, %cst_36 [1] : vector<8x8xf32> to vector<8xf32>
    %36 = vector.shape_cast %35 : vector<8xf32> to vector<8x1xf32>
    %37 = arith.truncf %34 : vector<8x8xf32> to vector<8x8xbf16>
    %cst_37 = arith.constant dense<0.000000e+00> : vector<8x8xf32>
    %38 = tpu.matmul %37, %28, %cst_37 {dimension_numbers = #tpu.dot_dimension_numbers<[1], [0], [0], [1], [0, 0, 1, 1], [], []>} : vector<8x8xbf16>, vector<8x8xbf16>, vector<8x8xf32> -> vector<8x8xf32>
    %39 = tpu.reciprocal %36 {approx = true} : vector<8x1xf32> -> vector<8x1xf32>
    %40 = vector.broadcast %39 : vector<8x1xf32> to vector<8x8xf32>
    %41 = arith.mulf %38, %40 : vector<8x8xf32>
    %42 = arith.truncf %41 : vector<8x8xf32> to vector<8x8xbf16>
    %c0_38 = arith.constant 0 : index
    %c0_39 = arith.constant 0 : index
    %c1_40 = arith.constant 1 : index
    %c0_41 = arith.constant 0 : index
    %43 = vector.load %arg2[%c0_38, %c0_39, %c1_40, %c0_41] : memref<8x1x4x8xbf16, #tpu.memory_space<vmem>>, vector<8x1x1x8xbf16>
    %44 = vector.shape_cast %43 : vector<8x1x1x8xbf16> to vector<8x8xbf16>
    %45 = vector.shape_cast %42 : vector<8x8xbf16> to vector<8x1x1x8xbf16>
    tpu.vector_store %arg2[%c0_38, %c0_39, %c1_40, %c0_41], %45 {strides = array<i32>} : memref<8x1x4x8xbf16, #tpu.memory_space<vmem>>, vector<8x1x1x8xbf16>,
    %c0_42 = arith.constant 0 : index
    %c0_43 = arith.constant 0 : index
    %c0_44 = arith.constant 0 : index
    %c2_45 = arith.constant 2 : index
    %c0_46 = arith.constant 0 : index
    %46 = vector.load %arg1[%c0_42, %c0_43, %c0_44, %c2_45, %c0_46] : memref<8x1x3x4x8xbf16, #tpu.memory_space<vmem>>, vector<8x1x1x1x8xbf16>
    %47 = vector.shape_cast %46 : vector<8x1x1x1x8xbf16> to vector<8x8xbf16>
    %c0_47 = arith.constant 0 : index
    %c0_48 = arith.constant 0 : index
    %c1_49 = arith.constant 1 : index
    %c2_50 = arith.constant 2 : index
    %c0_51 = arith.constant 0 : index
    %48 = vector.load %arg1[%c0_47, %c0_48, %c1_49, %c2_50, %c0_51] : memref<8x1x3x4x8xbf16, #tpu.memory_space<vmem>>, vector<8x1x1x1x8xbf16>
    %49 = vector.shape_cast %48 : vector<8x1x1x1x8xbf16> to vector<8x8xbf16>
    %c0_52 = arith.constant 0 : index
    %c0_53 = arith.constant 0 : index
    %c2_54 = arith.constant 2 : index
    %c2_55 = arith.constant 2 : index
    %c0_56 = arith.constant 0 : index
    %50 = vector.load %arg1[%c0_52, %c0_53, %c2_54, %c2_55, %c0_56] : memref<8x1x3x4x8xbf16, #tpu.memory_space<vmem>>, vector<8x1x1x1x8xbf16>
    %51 = vector.shape_cast %50 : vector<8x1x1x1x8xbf16> to vector<8x8xbf16>
    %cst_57 = arith.constant dense<0.000000e+00> : vector<8x8xf32>
    %52 = tpu.matmul %47, %49, %cst_57 {dimension_numbers = #tpu.dot_dimension_numbers<[1], [1], [0], [0], [0, 0, 1, 0], [], []>} : vector<8x8xbf16>, vector<8x8xbf16>, vector<8x8xf32> -> vector<8x8xf32>
    %cst_58 = arith.constant dense<0xFF800000> : vector<8xf32>
    %53 = vector.multi_reduction <maximumf>, %52, %cst_58 [1] : vector<8x8xf32> to vector<8xf32>
    %54 = vector.shape_cast %53 : vector<8xf32> to vector<8x1xf32>
    %55 = vector.broadcast %54 : vector<8x1xf32> to vector<8x8xf32>
    %56 = arith.subf %52, %55 : vector<8x8xf32>
    %57 = math.exp %56 : vector<8x8xf32>
    %cst_59 = arith.constant dense<0.000000e+00> : vector<8xf32>
    %58 = vector.multi_reduction <add>, %57, %cst_59 [1] : vector<8x8xf32> to vector<8xf32>
    %59 = vector.shape_cast %58 : vector<8xf32> to vector<8x1xf32>
    %60 = arith.truncf %57 : vector<8x8xf32> to vector<8x8xbf16>
    %cst_60 = arith.constant dense<0.000000e+00> : vector<8x8xf32>
    %61 = tpu.matmul %60, %51, %cst_60 {dimension_numbers = #tpu.dot_dimension_numbers<[1], [0], [0], [1], [0, 0, 1, 1], [], []>} : vector<8x8xbf16>, vector<8x8xbf16>, vector<8x8xf32> -> vector<8x8xf32>
    %62 = tpu.reciprocal %59 {approx = true} : vector<8x1xf32> -> vector<8x1xf32>
    %63 = vector.broadcast %62 : vector<8x1xf32> to vector<8x8xf32>
    %64 = arith.mulf %61, %63 : vector<8x8xf32>
    %65 = arith.truncf %64 : vector<8x8xf32> to vector<8x8xbf16>
    %c0_61 = arith.constant 0 : index
    %c0_62 = arith.constant 0 : index
    %c2_63 = arith.constant 2 : index
    %c0_64 = arith.constant 0 : index
    %66 = vector.load %arg2[%c0_61, %c0_62, %c2_63, %c0_64] : memref<8x1x4x8xbf16, #tpu.memory_space<vmem>>, vector<8x1x1x8xbf16>
    %67 = vector.shape_cast %66 : vector<8x1x1x8xbf16> to vector<8x8xbf16>
    %68 = vector.shape_cast %65 : vector<8x8xbf16> to vector<8x1x1x8xbf16>
    tpu.vector_store %arg2[%c0_61, %c0_62, %c2_63, %c0_64], %68 {strides = array<i32>} : memref<8x1x4x8xbf16, #tpu.memory_space<vmem>>, vector<8x1x1x8xbf16>,
    %c0_65 = arith.constant 0 : index
    %c0_66 = arith.constant 0 : index
    %c0_67 = arith.constant 0 : index
    %c3 = arith.constant 3 : index
    %c0_68 = arith.constant 0 : index
    %69 = vector.load %arg1[%c0_65, %c0_66, %c0_67, %c3, %c0_68] : memref<8x1x3x4x8xbf16, #tpu.memory_space<vmem>>, vector<8x1x1x1x8xbf16>
    %70 = vector.shape_cast %69 : vector<8x1x1x1x8xbf16> to vector<8x8xbf16>
    %c0_69 = arith.constant 0 : index
    %c0_70 = arith.constant 0 : index
    %c1_71 = arith.constant 1 : index
    %c3_72 = arith.constant 3 : index
    %c0_73 = arith.constant 0 : index
    %71 = vector.load %arg1[%c0_69, %c0_70, %c1_71, %c3_72, %c0_73] : memref<8x1x3x4x8xbf16, #tpu.memory_space<vmem>>, vector<8x1x1x1x8xbf16>
    %72 = vector.shape_cast %71 : vector<8x1x1x1x8xbf16> to vector<8x8xbf16>
    %c0_74 = arith.constant 0 : index
    %c0_75 = arith.constant 0 : index
    %c2_76 = arith.constant 2 : index
    %c3_77 = arith.constant 3 : index
    %c0_78 = arith.constant 0 : index
    %73 = vector.load %arg1[%c0_74, %c0_75, %c2_76, %c3_77, %c0_78] : memref<8x1x3x4x8xbf16, #tpu.memory_space<vmem>>, vector<8x1x1x1x8xbf16>
    %74 = vector.shape_cast %73 : vector<8x1x1x1x8xbf16> to vector<8x8xbf16>
    %cst_79 = arith.constant dense<0.000000e+00> : vector<8x8xf32>
    %75 = tpu.matmul %70, %72, %cst_79 {dimension_numbers = #tpu.dot_dimension_numbers<[1], [1], [0], [0], [0, 0, 1, 0], [], []>} : vector<8x8xbf16>, vector<8x8xbf16>, vector<8x8xf32> -> vector<8x8xf32>
    %cst_80 = arith.constant dense<0xFF800000> : vector<8xf32>
    %76 = vector.multi_reduction <maximumf>, %75, %cst_80 [1] : vector<8x8xf32> to vector<8xf32>
    %77 = vector.shape_cast %76 : vector<8xf32> to vector<8x1xf32>
    %78 = vector.broadcast %77 : vector<8x1xf32> to vector<8x8xf32>
    %79 = arith.subf %75, %78 : vector<8x8xf32>
    %80 = math.exp %79 : vector<8x8xf32>
    %cst_81 = arith.constant dense<0.000000e+00> : vector<8xf32>
    %81 = vector.multi_reduction <add>, %80, %cst_81 [1] : vector<8x8xf32> to vector<8xf32>
    %82 = vector.shape_cast %81 : vector<8xf32> to vector<8x1xf32>
    %83 = arith.truncf %80 : vector<8x8xf32> to vector<8x8xbf16>
    %cst_82 = arith.constant dense<0.000000e+00> : vector<8x8xf32>
    %84 = tpu.matmul %83, %74, %cst_82 {dimension_numbers = #tpu.dot_dimension_numbers<[1], [0], [0], [1], [0, 0, 1, 1], [], []>} : vector<8x8xbf16>, vector<8x8xbf16>, vector<8x8xf32> -> vector<8x8xf32>
    %85 = tpu.reciprocal %82 {approx = true} : vector<8x1xf32> -> vector<8x1xf32>
    %86 = vector.broadcast %85 : vector<8x1xf32> to vector<8x8xf32>
    %87 = arith.mulf %84, %86 : vector<8x8xf32>
    %88 = arith.truncf %87 : vector<8x8xf32> to vector<8x8xbf16>
    %c0_83 = arith.constant 0 : index
    %c0_84 = arith.constant 0 : index
    %c3_85 = arith.constant 3 : index
    %c0_86 = arith.constant 0 : index
    %89 = vector.load %arg2[%c0_83, %c0_84, %c3_85, %c0_86] : memref<8x1x4x8xbf16, #tpu.memory_space<vmem>>, vector<8x1x1x8xbf16>
    %90 = vector.shape_cast %89 : vector<8x1x1x8xbf16> to vector<8x8xbf16>
    %91 = vector.shape_cast %88 : vector<8x8xbf16> to vector<8x1x1x8xbf16>
    tpu.vector_store %arg2[%c0_83, %c0_84, %c3_85, %c0_86], %91 {strides = array<i32>} : memref<8x1x4x8xbf16, #tpu.memory_space<vmem>>, vector<8x1x1x8xbf16>,
    return
  }
  func.func @transform_0(%arg0: i32) -> (i32, i32, i32, i32, i32) {
    %c0_i32 = arith.constant 0 : i32
    %c0_i32_0 = arith.constant 0 : i32
    %c0_i32_1 = arith.constant 0 : i32
    %c0_i32_2 = arith.constant 0 : i32
    %c0_i32_3 = arith.constant 0 : i32
    return %c0_i32, %arg0, %c0_i32_0, %c0_i32_1, %c0_i32_2 : i32, i32, i32, i32, i32
  }
  func.func @transform_1(%arg0: i32) -> (i32, i32, i32, i32) {
    %c0_i32 = arith.constant 0 : i32
    %c0_i32_0 = arith.constant 0 : i32
    %c0_i32_1 = arith.constant 0 : i32
    %c0_i32_2 = arith.constant 0 : i32
    return %c0_i32, %arg0, %c0_i32_0, %c0_i32_1 : i32, i32, i32, i32
  }
}

module attributes {stable_mosaic.version = 11 : i64} {
  func.func @_ffn_kernel(%arg0: i32, %arg1: i32, %arg2: memref<16x32xf32, #tpu.memory_space<vmem>>, %arg3: memref<32x64xbf16, #tpu.memory_space<vmem>>, %arg4: memref<1x64xf32, #tpu.memory_space<vmem>>, %arg5: memref<64x32xbf16, #tpu.memory_space<vmem>>, %arg6: memref<1x32xf32, #tpu.memory_space<vmem>>, %arg7: memref<1x32xf32, #tpu.memory_space<vmem>>, %arg8: memref<1x32xf32, #tpu.memory_space<vmem>>, %arg9: memref<16x32xf32, #tpu.memory_space<vmem>>, %arg10: memref<16x32xf32, #tpu.memory_space<vmem>>) attributes {dimension_semantics = [#tpu.dimension_semantics<parallel>, #tpu.dimension_semantics<arbitrary>], iteration_bounds = array<i64: 1, 1>, scalar_prefetch = 0 : i64, scratch_operands = 1 : i64, tpu.core_type = #tpu.core_type<tc>, window_params = [{transform_indices = @transform_0, window_bounds = array<i64: 16, 32>}, {transform_indices = @transform_1, window_bounds = array<i64: 32, 64>}, {transform_indices = @transform_2, window_bounds = array<i64: 1, 64>}, {transform_indices = @transform_3, window_bounds = array<i64: 64, 32>}, {pipeline_mode = #tpu.pipeline_mode<synchronous>, transform_indices = @transform_4, window_bounds = array<i64: 1, 32>}, {pipeline_mode = #tpu.pipeline_mode<synchronous>, transform_indices = @transform_5, window_bounds = array<i64: 1, 32>}, {pipeline_mode = #tpu.pipeline_mode<synchronous>, transform_indices = @transform_6, window_bounds = array<i64: 1, 32>}, {transform_indices = @transform_7, window_bounds = array<i64: 16, 32>}]} {
    %c0_i32 = arith.constant 0 : i32
    %0 = arith.cmpi eq, %arg1, %c0_i32 : i32
    %1 = arith.extui %0 : i1 to i32
    %c0_i32_0 = arith.constant 0 : i32
    %2 = arith.cmpi ne, %1, %c0_i32_0 : i32
    scf.if %2 {
      %cst_16 = arith.constant 0.000000e+00 : f32
      %21 = vector.broadcast %cst_16 : f32 to vector<16x32xf32>
      %c0_17 = arith.constant 0 : index
      %c0_18 = arith.constant 0 : index
      %22 = vector.load %arg10[%c0_17, %c0_18] : memref<16x32xf32, #tpu.memory_space<vmem>>, vector<16x32xf32>
      tpu.vector_store %arg10[%c0_17, %c0_18], %21 {strides = array<i32>} : memref<16x32xf32, #tpu.memory_space<vmem>>, vector<16x32xf32>,
    } else {
    }
    %c0 = arith.constant 0 : index
    %c0_1 = arith.constant 0 : index
    %3 = vector.load %arg2[%c0, %c0_1] : memref<16x32xf32, #tpu.memory_space<vmem>>, vector<16x32xf32>
    %4 = arith.truncf %3 : vector<16x32xf32> to vector<16x32xbf16>
    %c0_2 = arith.constant 0 : index
    %c0_3 = arith.constant 0 : index
    %5 = vector.load %arg3[%c0_2, %c0_3] : memref<32x64xbf16, #tpu.memory_space<vmem>>, vector<32x64xbf16>
    %cst = arith.constant dense<0.000000e+00> : vector<16x64xf32>
    %6 = tpu.matmul %4, %5, %cst {dimension_numbers = #tpu.dot_dimension_numbers<[1], [0], [0], [1], [0, 0, 1, 1], [], []>} : vector<16x32xbf16>, vector<32x64xbf16>, vector<16x64xf32> -> vector<16x64xf32>
    %c0_4 = arith.constant 0 : index
    %c0_5 = arith.constant 0 : index
    %7 = vector.load %arg4[%c0_4, %c0_5] : memref<1x64xf32, #tpu.memory_space<vmem>>, vector<1x64xf32>
    %8 = vector.broadcast %7 : vector<1x64xf32> to vector<16x64xf32>
    %9 = arith.addf %6, %8 : vector<16x64xf32>
    %cst_6 = arith.constant 0.000000e+00 : f32
    %10 = vector.broadcast %cst_6 : f32 to vector<16x64xf32>
    %11 = arith.maximumf %9, %10 : vector<16x64xf32>
    %c0_7 = arith.constant 0 : index
    %c0_8 = arith.constant 0 : index
    %12 = vector.load %arg10[%c0_7, %c0_8] : memref<16x32xf32, #tpu.memory_space<vmem>>, vector<16x32xf32>
    %13 = arith.truncf %11 : vector<16x64xf32> to vector<16x64xbf16>
    %c0_9 = arith.constant 0 : index
    %c0_10 = arith.constant 0 : index
    %14 = vector.load %arg5[%c0_9, %c0_10] : memref<64x32xbf16, #tpu.memory_space<vmem>>, vector<64x32xbf16>
    %cst_11 = arith.constant dense<0.000000e+00> : vector<16x32xf32>
    %15 = tpu.matmul %13, %14, %cst_11 {dimension_numbers = #tpu.dot_dimension_numbers<[1], [0], [0], [1], [0, 0, 1, 1], [], []>} : vector<16x64xbf16>, vector<64x32xbf16>, vector<16x32xf32> -> vector<16x32xf32>
    %16 = arith.addf %12, %15 : vector<16x32xf32>
    %c0_12 = arith.constant 0 : index
    %c0_13 = arith.constant 0 : index
    %17 = vector.load %arg10[%c0_12, %c0_13] : memref<16x32xf32, #tpu.memory_space<vmem>>, vector<16x32xf32>
    tpu.vector_store %arg10[%c0_12, %c0_13], %16 {strides = array<i32>} : memref<16x32xf32, #tpu.memory_space<vmem>>, vector<16x32xf32>,
    %c0_i32_14 = arith.constant 0 : i32
    %18 = arith.cmpi eq, %arg1, %c0_i32_14 : i32
    %19 = arith.extui %18 : i1 to i32
    %c0_i32_15 = arith.constant 0 : i32
    %20 = arith.cmpi ne, %19, %c0_i32_15 : i32
    scf.if %20 {
      %c0_16 = arith.constant 0 : index
      %c0_17 = arith.constant 0 : index
      %21 = vector.load %arg10[%c0_16, %c0_17] : memref<16x32xf32, #tpu.memory_space<vmem>>, vector<16x32xf32>
      %22 = arith.addf %3, %21 : vector<16x32xf32>
      %c0_18 = arith.constant 0 : index
      %c0_19 = arith.constant 0 : index
      %23 = vector.load %arg6[%c0_18, %c0_19] : memref<1x32xf32, #tpu.memory_space<vmem>>, vector<1x32xf32>
      %24 = vector.broadcast %23 : vector<1x32xf32> to vector<16x32xf32>
      %25 = arith.addf %22, %24 : vector<16x32xf32>
      %c0_20 = arith.constant 0 : index
      %c0_21 = arith.constant 0 : index
      %26 = vector.load %arg7[%c0_20, %c0_21] : memref<1x32xf32, #tpu.memory_space<vmem>>, vector<1x32xf32>
      %c0_22 = arith.constant 0 : index
      %c0_23 = arith.constant 0 : index
      %27 = vector.load %arg8[%c0_22, %c0_23] : memref<1x32xf32, #tpu.memory_space<vmem>>, vector<1x32xf32>
      %cst_24 = arith.constant dense<0.000000e+00> : vector<16xf32>
      %28 = vector.multi_reduction <add>, %25, %cst_24 [1] : vector<16x32xf32> to vector<16xf32>
      %29 = vector.shape_cast %28 : vector<16xf32> to vector<16x1xf32>
      %cst_25 = arith.constant 3.200000e+01 : f32
      %30 = vector.broadcast %cst_25 : f32 to vector<16x1xf32>
      %31 = arith.divf %29, %30 : vector<16x1xf32>
      %32 = vector.broadcast %31 : vector<16x1xf32> to vector<16x32xf32>
      %33 = arith.subf %25, %32 : vector<16x32xf32>
      %34 = arith.mulf %33, %33 : vector<16x32xf32>
      %cst_26 = arith.constant dense<0.000000e+00> : vector<16xf32>
      %35 = vector.multi_reduction <add>, %34, %cst_26 [1] : vector<16x32xf32> to vector<16xf32>
      %36 = vector.shape_cast %35 : vector<16xf32> to vector<16x1xf32>
      %cst_27 = arith.constant 3.200000e+01 : f32
      %37 = vector.broadcast %cst_27 : f32 to vector<16x1xf32>
      %38 = arith.divf %36, %37 : vector<16x1xf32>
      %cst_28 = arith.constant 9.99999974E-6 : f32
      %39 = vector.broadcast %cst_28 : f32 to vector<16x1xf32>
      %40 = arith.addf %38, %39 : vector<16x1xf32>
      %41 = math.rsqrt %40 : vector<16x1xf32>
      %42 = vector.broadcast %41 : vector<16x1xf32> to vector<16x32xf32>
      %43 = arith.mulf %33, %42 : vector<16x32xf32>
      %44 = vector.broadcast %26 : vector<1x32xf32> to vector<16x32xf32>
      %45 = arith.mulf %43, %44 : vector<16x32xf32>
      %46 = vector.broadcast %27 : vector<1x32xf32> to vector<16x32xf32>
      %47 = arith.addf %45, %46 : vector<16x32xf32>
      %c0_29 = arith.constant 0 : index
      %c0_30 = arith.constant 0 : index
      %48 = vector.load %arg9[%c0_29, %c0_30] : memref<16x32xf32, #tpu.memory_space<vmem>>, vector<16x32xf32>
      tpu.vector_store %arg9[%c0_29, %c0_30], %47 {strides = array<i32>} : memref<16x32xf32, #tpu.memory_space<vmem>>, vector<16x32xf32>,
    } else {
    }
    return
  }
  func.func @transform_0(%arg0: i32, %arg1: i32) -> (i32, i32) {
    %c0_i32 = arith.constant 0 : i32
    %c0_i32_0 = arith.constant 0 : i32
    return %arg0, %c0_i32 : i32, i32
  }
  func.func @transform_1(%arg0: i32, %arg1: i32) -> (i32, i32) {
    %c0_i32 = arith.constant 0 : i32
    %c0_i32_0 = arith.constant 0 : i32
    return %c0_i32, %arg1 : i32, i32
  }
  func.func @transform_2(%arg0: i32, %arg1: i32) -> (i32, i32) {
    %c0_i32 = arith.constant 0 : i32
    %c0_i32_0 = arith.constant 0 : i32
    return %c0_i32, %arg1 : i32, i32
  }
  func.func @transform_3(%arg0: i32, %arg1: i32) -> (i32, i32) {
    %c0_i32 = arith.constant 0 : i32
    %c0_i32_0 = arith.constant 0 : i32
    return %arg1, %c0_i32 : i32, i32
  }
  func.func @transform_4(%arg0: i32, %arg1: i32) -> (i32, i32) {
    %c0_i32 = arith.constant 0 : i32
    %c0_i32_0 = arith.constant 0 : i32
    %c0_i32_1 = arith.constant 0 : i32
    return %c0_i32, %c0_i32_0 : i32, i32
  }
  func.func @transform_5(%arg0: i32, %arg1: i32) -> (i32, i32) {
    %c0_i32 = arith.constant 0 : i32
    %c0_i32_0 = arith.constant 0 : i32
    %c0_i32_1 = arith.constant 0 : i32
    return %c0_i32, %c0_i32_0 : i32, i32
  }
  func.func @transform_6(%arg0: i32, %arg1: i32) -> (i32, i32) {
    %c0_i32 = arith.constant 0 : i32
    %c0_i32_0 = arith.constant 0 : i32
    %c0_i32_1 = arith.constant 0 : i32
    return %c0_i32, %c0_i32_0 : i32, i32
  }
  func.func @transform_7(%arg0: i32, %arg1: i32) -> (i32, i32) {
    %c0_i32 = arith.constant 0 : i32
    %c0_i32_0 = arith.constant 0 : i32
    return %arg0, %c0_i32 : i32, i32
  }
}

module attributes {stable_mosaic.version = 11 : i64} {
  func.func @_attn_out_kernel(%arg0: i32, %arg1: memref<16x32xbf16, #tpu.memory_space<vmem>>, %arg2: memref<16x32xf32, #tpu.memory_space<vmem>>, %arg3: memref<32x32xbf16, #tpu.memory_space<vmem>>, %arg4: memref<1x32xf32, #tpu.memory_space<vmem>>, %arg5: memref<1x32xf32, #tpu.memory_space<vmem>>, %arg6: memref<1x32xf32, #tpu.memory_space<vmem>>, %arg7: memref<16x32xf32, #tpu.memory_space<vmem>>) attributes {dimension_semantics = [#tpu.dimension_semantics<parallel>], iteration_bounds = array<i64: 1>, scalar_prefetch = 0 : i64, scratch_operands = 0 : i64, tpu.core_type = #tpu.core_type<tc>, window_params = [{transform_indices = @transform_0, window_bounds = array<i64: 16, 32>}, {transform_indices = @transform_1, window_bounds = array<i64: 16, 32>}, {pipeline_mode = #tpu.pipeline_mode<synchronous>, transform_indices = @transform_2, window_bounds = array<i64: 32, 32>}, {pipeline_mode = #tpu.pipeline_mode<synchronous>, transform_indices = @transform_3, window_bounds = array<i64: 1, 32>}, {pipeline_mode = #tpu.pipeline_mode<synchronous>, transform_indices = @transform_4, window_bounds = array<i64: 1, 32>}, {pipeline_mode = #tpu.pipeline_mode<synchronous>, transform_indices = @transform_5, window_bounds = array<i64: 1, 32>}, {transform_indices = @transform_6, window_bounds = array<i64: 16, 32>}]} {
    %c0 = arith.constant 0 : index
    %c0_0 = arith.constant 0 : index
    %0 = vector.load %arg1[%c0, %c0_0] : memref<16x32xbf16, #tpu.memory_space<vmem>>, vector<16x32xbf16>
    %c0_1 = arith.constant 0 : index
    %c0_2 = arith.constant 0 : index
    %1 = vector.load %arg3[%c0_1, %c0_2] : memref<32x32xbf16, #tpu.memory_space<vmem>>, vector<32x32xbf16>
    %cst = arith.constant dense<0.000000e+00> : vector<16x32xf32>
    %2 = tpu.matmul %0, %1, %cst {dimension_numbers = #tpu.dot_dimension_numbers<[1], [0], [0], [1], [0, 0, 1, 1], [], []>} : vector<16x32xbf16>, vector<32x32xbf16>, vector<16x32xf32> -> vector<16x32xf32>
    %c0_3 = arith.constant 0 : index
    %c0_4 = arith.constant 0 : index
    %3 = vector.load %arg2[%c0_3, %c0_4] : memref<16x32xf32, #tpu.memory_space<vmem>>, vector<16x32xf32>
    %4 = arith.addf %3, %2 : vector<16x32xf32>
    %c0_5 = arith.constant 0 : index
    %c0_6 = arith.constant 0 : index
    %5 = vector.load %arg4[%c0_5, %c0_6] : memref<1x32xf32, #tpu.memory_space<vmem>>, vector<1x32xf32>
    %6 = vector.broadcast %5 : vector<1x32xf32> to vector<16x32xf32>
    %7 = arith.addf %4, %6 : vector<16x32xf32>
    %c0_7 = arith.constant 0 : index
    %c0_8 = arith.constant 0 : index
    %8 = vector.load %arg5[%c0_7, %c0_8] : memref<1x32xf32, #tpu.memory_space<vmem>>, vector<1x32xf32>
    %c0_9 = arith.constant 0 : index
    %c0_10 = arith.constant 0 : index
    %9 = vector.load %arg6[%c0_9, %c0_10] : memref<1x32xf32, #tpu.memory_space<vmem>>, vector<1x32xf32>
    %cst_11 = arith.constant dense<0.000000e+00> : vector<16xf32>
    %10 = vector.multi_reduction <add>, %7, %cst_11 [1] : vector<16x32xf32> to vector<16xf32>
    %11 = vector.shape_cast %10 : vector<16xf32> to vector<16x1xf32>
    %cst_12 = arith.constant 3.200000e+01 : f32
    %12 = vector.broadcast %cst_12 : f32 to vector<16x1xf32>
    %13 = arith.divf %11, %12 : vector<16x1xf32>
    %14 = vector.broadcast %13 : vector<16x1xf32> to vector<16x32xf32>
    %15 = arith.subf %7, %14 : vector<16x32xf32>
    %16 = arith.mulf %15, %15 : vector<16x32xf32>
    %cst_13 = arith.constant dense<0.000000e+00> : vector<16xf32>
    %17 = vector.multi_reduction <add>, %16, %cst_13 [1] : vector<16x32xf32> to vector<16xf32>
    %18 = vector.shape_cast %17 : vector<16xf32> to vector<16x1xf32>
    %cst_14 = arith.constant 3.200000e+01 : f32
    %19 = vector.broadcast %cst_14 : f32 to vector<16x1xf32>
    %20 = arith.divf %18, %19 : vector<16x1xf32>
    %cst_15 = arith.constant 9.99999974E-6 : f32
    %21 = vector.broadcast %cst_15 : f32 to vector<16x1xf32>
    %22 = arith.addf %20, %21 : vector<16x1xf32>
    %23 = math.rsqrt %22 : vector<16x1xf32>
    %24 = vector.broadcast %23 : vector<16x1xf32> to vector<16x32xf32>
    %25 = arith.mulf %15, %24 : vector<16x32xf32>
    %26 = vector.broadcast %8 : vector<1x32xf32> to vector<16x32xf32>
    %27 = arith.mulf %25, %26 : vector<16x32xf32>
    %28 = vector.broadcast %9 : vector<1x32xf32> to vector<16x32xf32>
    %29 = arith.addf %27, %28 : vector<16x32xf32>
    %c0_16 = arith.constant 0 : index
    %c0_17 = arith.constant 0 : index
    %30 = vector.load %arg7[%c0_16, %c0_17] : memref<16x32xf32, #tpu.memory_space<vmem>>, vector<16x32xf32>
    tpu.vector_store %arg7[%c0_16, %c0_17], %29 {strides = array<i32>} : memref<16x32xf32, #tpu.memory_space<vmem>>, vector<16x32xf32>,
    return
  }
  func.func @transform_0(%arg0: i32) -> (i32, i32) {
    %c0_i32 = arith.constant 0 : i32
    %c0_i32_0 = arith.constant 0 : i32
    return %arg0, %c0_i32 : i32, i32
  }
  func.func @transform_1(%arg0: i32) -> (i32, i32) {
    %c0_i32 = arith.constant 0 : i32
    %c0_i32_0 = arith.constant 0 : i32
    return %arg0, %c0_i32 : i32, i32
  }
  func.func @transform_2(%arg0: i32) -> (i32, i32) {
    %c0_i32 = arith.constant 0 : i32
    %c0_i32_0 = arith.constant 0 : i32
    %c0_i32_1 = arith.constant 0 : i32
    return %c0_i32, %c0_i32_0 : i32, i32
  }
  func.func @transform_3(%arg0: i32) -> (i32, i32) {
    %c0_i32 = arith.constant 0 : i32
    %c0_i32_0 = arith.constant 0 : i32
    %c0_i32_1 = arith.constant 0 : i32
    return %c0_i32, %c0_i32_0 : i32, i32
  }
  func.func @transform_4(%arg0: i32) -> (i32, i32) {
    %c0_i32 = arith.constant 0 : i32
    %c0_i32_0 = arith.constant 0 : i32
    %c0_i32_1 = arith.constant 0 : i32
    return %c0_i32, %c0_i32_0 : i32, i32
  }
  func.func @transform_5(%arg0: i32) -> (i32, i32) {
    %c0_i32 = arith.constant 0 : i32
    %c0_i32_0 = arith.constant 0 : i32
    %c0_i32_1 = arith.constant 0 : i32
    return %c0_i32, %c0_i32_0 : i32, i32
  }
  func.func @transform_6(%arg0: i32) -> (i32, i32) {
    %c0_i32 = arith.constant 0 : i32
    %c0_i32_0 = arith.constant 0 : i32
    return %arg0, %c0_i32 : i32, i32
  }
}

</mosaic_0001>

<llo_original>
// kernel: transformer_sentence_encoder_layer_forward.4
$region0: #{transformer_sentence_encoder_layer_forward.4}
  #allocation0 [shape = 'u32[]', space=smem, size = 0x4, offset = 0x4, fixed_abs, tag = 'smem constant byte address 0x4 - core index']
  #allocation1 [shape = 'u32[72,128]{1,0:T(1,128)}', space=vmem, size = 0x9000, scoped, tag = 'internal scratch']
  %s0 = inlined_call_operand.hbm [shape: f32[16,32], index: 0, kind: input, shape index: {}]
  %s1 = inlined_call_operand.hbm [shape: bf16[32,96], index: 1, kind: input, shape index: {}]
  %s2 = inlined_call_operand.vmem [shape: f32[1,96], index: 2, kind: input, shape index: {}]
  %s3 = inlined_call_operand.vmem [shape: bf16[16,96], index: 3, kind: output, shape index: {}]
  %s4 = sld [smem:[#allocation0]]
  $region30: #{transformer_sentence_encoder_layer_forward.4} parent=0
    _
  %s6 = ssub.s32 1, %s4
  %s7 = scalar_select 0, %s6, %s4
  $region1: #{transformer_sentence_encoder_layer_forward.4} parent=0
    #allocation2 [shape = 'u8[8192]{0}', space=vmem, size = 0x2000, scoped, tag = 'input window, operand 0, single buffered']
    #allocation3 [shape = 's32[1]{0}', space=sflag, size = 0x4, scoped, tag = 'scoped memory for transformer_sentence_encoder_layer_forward.4']
    #allocation4 [shape = 'u8[8192]{0}', space=vmem, size = 0x2000, scoped, tag = 'input window, operand 1, single buffered']
    #allocation5 [shape = 's32[1]{0}', space=sflag, size = 0x4, scoped, tag = 'scoped memory for transformer_sentence_encoder_layer_forward.4']
    %8 = vsyncpa [#allocation3], 0
    %9 = vsyncpa [#allocation5], 0
    // Predicated region
    $region2: #{transformer_sentence_encoder_layer_forward.4} parent=1 // pred_check
      _
    $region3: #{transformer_sentence_encoder_layer_forward.4} parent=1 // pred_check_branch
      %11 = sbr.rel (0) target = $region5
    $region4: #{transformer_sentence_encoder_layer_forward.4} parent=1 // pred_region
      %13 = vsyncadd [#allocation3], 0
      %s14 = sshll.u32 %s0, 4
      %s15 = int_to_ptr.hbm [resolvable:$true] %s14
      %s16 = sshll.u32 [#allocation2], 4
      %s17 = int_to_ptr.vmem [resolvable:$true] %s16
      %22 = dma.hbm_to_vmem [thread:$0]  %s15, 256, %s17, [#allocation3], 128, 128, 8
    $region5: #{transformer_sentence_encoder_layer_forward.4} parent=1 // pred_fallthru
      _
    // Predicated region
    $region6: #{transformer_sentence_encoder_layer_forward.4} parent=1 // pred_check
      _
    $region7: #{transformer_sentence_encoder_layer_forward.4} parent=1 // pred_check_branch
      %24 = sbr.rel (0) target = $region9
    $region8: #{transformer_sentence_encoder_layer_forward.4} parent=1 // pred_region
      %26 = vsyncadd [#allocation5], 0
      %s27 = sshll.u32 %s1, 4
      %s28 = int_to_ptr.hbm [resolvable:$true] %s27
      %s29 = sshll.u32 [#allocation4], 4
      %s30 = int_to_ptr.vmem [resolvable:$true] %s29
      %35 = dma.hbm_to_vmem [thread:$0]  %s28, 256, %s30, [#allocation5], 64, 64, 4
    $region9: #{transformer_sentence_encoder_layer_forward.4} parent=1 // pred_fallthru
      _
    // Predicated region
    $region10: #{transformer_sentence_encoder_layer_forward.4} parent=1 // pred_check
      _
    $region11: #{transformer_sentence_encoder_layer_forward.4} parent=1 // pred_check_branch
      %37 = sbr.rel (0) target = $region13
    $region12: #{transformer_sentence_encoder_layer_forward.4} parent=1 // pred_region
      _
    $region13: #{transformer_sentence_encoder_layer_forward.4} parent=1 // pred_fallthru
      _
    // Predicated region
    $region14: #{transformer_sentence_encoder_layer_forward.4} parent=1 // pred_check
      _
    $region15: #{transformer_sentence_encoder_layer_forward.4} parent=1 // pred_check_branch
      %39 = sbr.rel (0) target = $region17
    $region16: #{transformer_sentence_encoder_layer_forward.4} parent=1 // pred_region
      %41 = dma.done [#allocation3], 256
    $region17: #{transformer_sentence_encoder_layer_forward.4} parent=1 // pred_fallthru
      _
    // Predicated region
    $region18: #{transformer_sentence_encoder_layer_forward.4} parent=1 // pred_check
      _
    $region19: #{transformer_sentence_encoder_layer_forward.4} parent=1 // pred_check_branch
      %43 = sbr.rel (0) target = $region21
    $region20: #{transformer_sentence_encoder_layer_forward.4} parent=1 // pred_region
      %45 = dma.done [#allocation5], 256
    $region21: #{transformer_sentence_encoder_layer_forward.4} parent=1 // pred_fallthru
      _
    %v47 = vld [vmem:[#allocation2] sm:$0xff]
    %v48 = vld [vmem:[#allocation2 + $0x8] sm:$0xff]
    %v49 = vpack.c.bf16 %v48, %v47
    %v50 = vld [vmem:[#allocation4] sm:$0xf]
    %v51 = vld [vmem:[#allocation4 + $0x4] sm:$0xf]
    %v52 = vld [vmem:[#allocation4 + $0x8] sm:$0xf]
    %v53 = vld [vmem:[#allocation4 + $0xc] sm:$0xf]
    %v54 = vld [vmem:[%s2] sm:$0x1]
    %v56 = vperm.slane %v54, 0
    %v62 = vunpack.c.l.b16 %v50
    %v63 = vunpack.c.l.b16 %v51
    %v64 = vunpack.c.l.b16 %v52
    %v65 = vunpack.c.l.b16 %v53
    %v66 = vpack.c.b16 %v63, %v62
    %v67 = vpack.c.b16 %v65, %v64
    %vm70 = vcmask 261120
    %v72 = vsel %vm70, %v49, 0
    %74 = vmatpush.bf16.msra.mxu0 0
    %75 = vmatpush.bf16.msra.mxu0 0
    %76 = vmatpush.bf16.msra.mxu0 0
    %77 = vmatpush.bf16.msra.mxu0 0
    %78 = vmatpush.bf16.msra.mxu0 0
    %79 = vmatpush.bf16.msra.mxu0 0
    %80 = vmatpush.bf16.msra.mxu0 %v67
    %81 = vmatpush.bf16.msra.mxu0 %v66
    %82 = vmatmul.bf16.gmra.mxu0 %v72
    %v83 = vpop.f32.mrf.mxu0
    %v84 = vadd.f32 %v56, %v83
    %v85 = vpop.f32.mrf.mxu0
    %v86 = vadd.f32 %v56, %v85
    %87 = vdwg.mxu0
    %v88 = vpack.c.bf16 %v84, %v84
    %v89 = vpack.c.bf16 %v86, %v86
    %vm90 = vcmask 781312
    %91 = vst.msk [vmem:[%s3] sm:$0xf] %vm90, %v88
    %92 = vst.msk [vmem:[%s3 + $0x4] sm:$0xf] %vm90, %v89
    // Predicated region
    $region22: #{transformer_sentence_encoder_layer_forward.4} parent=1 // pred_check
      _
    $region23: #{transformer_sentence_encoder_layer_forward.4} parent=1 // pred_check_branch
      %94 = sbr.rel (0) target = $region25
    $region24: #{transformer_sentence_encoder_layer_forward.4} parent=1 // pred_region
      _
    $region25: #{transformer_sentence_encoder_layer_forward.4} parent=1 // pred_fallthru
      _
    // Predicated region
    $region26: #{transformer_sentence_encoder_layer_forward.4} parent=1 // pred_check
      _
    $region27: #{transformer_sentence_encoder_layer_forward.4} parent=1 // pred_check_branch
      %96 = sbr.rel (0) target = $region29
    $region28: #{transformer_sentence_encoder_layer_forward.4} parent=1 // pred_region
      _
    $region29: #{transformer_sentence_encoder_layer_forward.4} parent=1 // pred_fallthru
      _
    %97 = vsyncpa [#allocation3], 1
    %98 = vsyncpa [#allocation5], 1

// kernel: transformer_sentence_encoder_layer_forward.6
$region0: #{transformer_sentence_encoder_layer_forward.6}
  #allocation0 [shape = 'u32[]', space=smem, size = 0x4, offset = 0x4, fixed_abs, tag = 'smem constant byte address 0x4 - core index']
  #allocation1 [shape = 'u32[72,128]{1,0:T(1,128)}', space=vmem, size = 0x9000, scoped, tag = 'internal scratch']
  %s0 = inlined_call_operand.vmem [shape: bf16[16,32], index: 0, kind: input, shape index: {}]
  %s1 = inlined_call_operand.vmem [shape: f32[16,32], index: 1, kind: input, shape index: {}]
  %s2 = inlined_call_operand.vmem [shape: bf16[32,32], index: 2, kind: input, shape index: {}]
  %s3 = inlined_call_operand.vmem [shape: f32[1,32], index: 3, kind: input, shape index: {}]
  %s4 = inlined_call_operand.vmem [shape: f32[1,32], index: 4, kind: input, shape index: {}]
  %s5 = inlined_call_operand.vmem [shape: f32[1,32], index: 5, kind: input, shape index: {}]
  %s6 = inlined_call_operand.vmem [shape: f32[16,32], index: 6, kind: output, shape index: {}]
  %s7 = sld [smem:[#allocation0]]
  $region34: #{transformer_sentence_encoder_layer_forward.6} parent=0
    _
  %s9 = ssub.s32 1, %s7
  %s10 = scalar_select 0, %s9, %s7
  // Predicated region
  $region2: #{transformer_sentence_encoder_layer_forward.6} parent=0 // pred_check
    _
  $region3: #{transformer_sentence_encoder_layer_forward.6} parent=0 // pred_check_branch
    %12 = sbr.rel (0) target = $region5
  $region4: #{transformer_sentence_encoder_layer_forward.6} parent=0 // pred_region
    _
  $region5: #{transformer_sentence_encoder_layer_forward.6} parent=0 // pred_fallthru
    _
  // Predicated region
  $region6: #{transformer_sentence_encoder_layer_forward.6} parent=0 // pred_check
    _
  $region7: #{transformer_sentence_encoder_layer_forward.6} parent=0 // pred_check_branch
    %14 = sbr.rel (0) target = $region9
  $region8: #{transformer_sentence_encoder_layer_forward.6} parent=0 // pred_region
    _
  $region9: #{transformer_sentence_encoder_layer_forward.6} parent=0 // pred_fallthru
    _
  // Predicated region
  $region10: #{transformer_sentence_encoder_layer_forward.6} parent=0 // pred_check
    _
  $region11: #{transformer_sentence_encoder_layer_forward.6} parent=0 // pred_check_branch
    %16 = sbr.rel (0) target = $region13
  $region12: #{transformer_sentence_encoder_layer_forward.6} parent=0 // pred_region
    _
  $region13: #{transformer_sentence_encoder_layer_forward.6} parent=0 // pred_fallthru
    _
  // Predicated region
  $region14: #{transformer_sentence_encoder_layer_forward.6} parent=0 // pred_check
    _
  $region15: #{transformer_sentence_encoder_layer_forward.6} parent=0 // pred_check_branch
    %18 = sbr.rel (0) target = $region17
  $region16: #{transformer_sentence_encoder_layer_forward.6} parent=0 // pred_region
    _
  $region17: #{transformer_sentence_encoder_layer_forward.6} parent=0 // pred_fallthru
    _
  // Predicated region
  $region18: #{transformer_sentence_encoder_layer_forward.6} parent=0 // pred_check
    _
  $region19: #{transformer_sentence_encoder_layer_forward.6} parent=0 // pred_check_branch
    %20 = sbr.rel (0) target = $region21
  $region20: #{transformer_sentence_encoder_layer_forward.6} parent=0 // pred_region
    _
  $region21: #{transformer_sentence_encoder_layer_forward.6} parent=0 // pred_fallthru
    _
  // Predicated region
  $region22: #{transformer_sentence_encoder_layer_forward.6} parent=0 // pred_check
    _
  $region23: #{transformer_sentence_encoder_layer_forward.6} parent=0 // pred_check_branch
    %22 = sbr.rel (0) target = $region25
  $region24: #{transformer_sentence_encoder_layer_forward.6} parent=0 // pred_region
    _
  $region25: #{transformer_sentence_encoder_layer_forward.6} parent=0 // pred_fallthru
    _
  %v24 = vld [vmem:[%s0] sm:$0xf]
  %v25 = vld [vmem:[%s0 + $0x4] sm:$0xf]
  %v26 = vld [vmem:[%s2] sm:$0xf]
  %v27 = vld [vmem:[%s2 + $0x4] sm:$0xf]
  %v28 = vld [vmem:[%s2 + $0x8] sm:$0xf]
  %v29 = vld [vmem:[%s2 + $0xc] sm:$0xf]
  %v32 = vunpack.c.l.b16 %v24
  %v33 = vunpack.c.l.b16 %v25
  %v34 = vpack.c.b16 %v33, %v32
  %v39 = vunpack.c.l.b16 %v26
  %v40 = vunpack.c.l.b16 %v27
  %v41 = vunpack.c.l.b16 %v28
  %v42 = vunpack.c.l.b16 %v29
  %v43 = vpack.c.b16 %v40, %v39
  %v44 = vpack.c.b16 %v42, %v41
  %vm47 = vcmask 261120
  %v49 = vsel %vm47, %v34, 0
  %51 = vmatpush.bf16.msra.mxu0 0
  %52 = vmatpush.bf16.msra.mxu0 0
  %53 = vmatpush.bf16.msra.mxu0 0
  %54 = vmatpush.bf16.msra.mxu0 0
  %55 = vmatpush.bf16.msra.mxu0 0
  %56 = vmatpush.bf16.msra.mxu0 0
  %57 = vmatpush.bf16.msra.mxu0 %v44
  %58 = vmatpush.bf16.msra.mxu0 %v43
  %59 = vmatmul.bf16.gmra.mxu0 %v49
  %v60 = vpop.f32.mrf.mxu0
  %v61 = vadd.f32 0.0, %v60
  %v62 = vpop.f32.mrf.mxu0
  %v63 = vadd.f32 0.0, %v62
  %64 = vdwg.mxu0
  %v65 = vld [vmem:[%s1] sm:$0xff]
  %v66 = vld [vmem:[%s1 + $0x8] sm:$0xff]
  %v67 = vadd.f32 %v65, %v61
  %v68 = vadd.f32 %v66, %v63
  %v69 = vld [vmem:[%s3] sm:$0x1]
  %v71 = vperm.slane %v69, 0
  %v73 = vadd.f32 %v67, %v71
  %v74 = vadd.f32 %v68, %v71
  %v75 = vld [vmem:[%s4] sm:$0x1]
  %v76 = vld [vmem:[%s5] sm:$0x1]
  %v77 = vsel %vm47, %v73, 0.0
  %78 = vadd.xlane.f32.xlu0 %v77
  %v79 = vpop.xlane.xlu0 %78
  %v80 = vsel %vm47, %v74, 0.0
  %81 = vadd.xlane.f32.xlu0 %v80
  %v82 = vpop.xlane.xlu0 %81
  %v83 = vrcp.pop 32.0
  %v84 = vmul.f32 32.0, %v83
  %v85 = vsub.f32 1.0, %v84
  %v86 = vmul.f32 %v83, %v85
  %v87 = vadd.f32 %v83, %v86
  %vm88 = vweird.f32 %v83
  %v89 = vsel %vm88, %v83, %v87
  %v90 = vmul.f32 %v79, %v89
  %v91 = vmul.f32 %v82, %v89
  %v92 = vsub.f32 %v73, %v90
  %v93 = vsub.f32 %v74, %v91
  %v94 = vmul.f32 %v92, %v92
  %v95 = vmul.f32 %v93, %v93
  %v96 = vsel %vm47, %v94, 0.0
  %97 = vadd.xlane.f32.xlu0 %v96
  %v98 = vpop.xlane.xlu0 %97
  %v99 = vsel %vm47, %v95, 0.0
  %100 = vadd.xlane.f32.xlu0 %v99
  %v101 = vpop.xlane.xlu0 %100
  %v102 = vmul.f32 %v98, %v89
  %v103 = vmul.f32 %v101, %v89
  %v104 = vadd.f32 %v102, 1e-05
  %v105 = vadd.f32 %v103, 1e-05
  %v106 = vrsqrt.pop %v104
  %v107 = vmul.f32 %v106, %v104
  %v108 = vmul.f32 %v107, %v106
  %v109 = vmul.f32 0.5, %v108
  %v110 = vsub.f32 1.5, %v109
  %v111 = vmul.f32 %v106, %v110
  %vm112 = vweird.f32 %v104
  %vm113 = vweird.f32 %v106
  %vm114 = vmor %vm112, %vm113
  %v115 = vsel %vm114, %v106, %v111
  %v116 = vrsqrt.pop %v105
  %v117 = vmul.f32 %v116, %v105
  %v118 = vmul.f32 %v117, %v116
  %v119 = vmul.f32 0.5, %v118
  %v120 = vsub.f32 1.5, %v119
  %v121 = vmul.f32 %v116, %v120
  %vm122 = vweird.f32 %v105
  %vm123 = vweird.f32 %v116
  %vm124 = vmor %vm122, %vm123
  %v125 = vsel %vm124, %v116, %v121
  %v126 = vmul.f32 %v92, %v115
  %v127 = vmul.f32 %v93, %v125
  %v129 = vperm.slane %v75, 0
  %v131 = vmul.f32 %v126, %v129
  %v132 = vmul.f32 %v127, %v129
  %v134 = vperm.slane %v76, 0
  %v136 = vadd.f32 %v131, %v134
  %v137 = vadd.f32 %v132, %v134
  %138 = vst.msk [vmem:[%s6] sm:$0xff] %vm47, %v136
  %139 = vst.msk [vmem:[%s6 + $0x8] sm:$0xff] %vm47, %v137
  // Predicated region
  $region26: #{transformer_sentence_encoder_layer_forward.6} parent=0 // pred_check
    _
  $region27: #{transformer_sentence_encoder_layer_forward.6} parent=0 // pred_check_branch
    %141 = sbr.rel (0) target = $region29
  $region28: #{transformer_sentence_encoder_layer_forward.6} parent=0 // pred_region
    _
  $region29: #{transformer_sentence_encoder_layer_forward.6} parent=0 // pred_fallthru
    _
  // Predicated region
  $region30: #{transformer_sentence_encoder_layer_forward.6} parent=0 // pred_check
    _
  $region31: #{transformer_sentence_encoder_layer_forward.6} parent=0 // pred_check_branch
    %143 = sbr.rel (0) target = $region33
  $region32: #{transformer_sentence_encoder_layer_forward.6} parent=0 // pred_region
    _
  $region33: #{transformer_sentence_encoder_layer_forward.6} parent=0 // pred_fallthru
    _

// kernel: transformer_sentence_encoder_layer_forward.7
$region0: #{transformer_sentence_encoder_layer_forward.7}
  #allocation0 [shape = 'u32[]', space=smem, size = 0x4, offset = 0x4, fixed_abs, tag = 'smem constant byte address 0x4 - core index']
  #allocation1 [shape = 'u32[72,128]{1,0:T(1,128)}', space=vmem, size = 0x9000, scoped, tag = 'internal scratch']
  #allocation2 [shape = 'f32[16,32]{1,0:T(8,128)}', space=vmem, size = 0x2000, scoped, tag = 'scratch operand']
  %s0 = inlined_call_operand.vmem [shape: f32[16,32], index: 0, kind: input, shape index: {}]
  %s1 = inlined_call_operand.vmem [shape: bf16[32,64], index: 1, kind: input, shape index: {}]
  %s2 = inlined_call_operand.vmem [shape: f32[1,64], index: 2, kind: input, shape index: {}]
  %s3 = inlined_call_operand.vmem [shape: bf16[64,32], index: 3, kind: input, shape index: {}]
  %s4 = inlined_call_operand.vmem [shape: f32[1,32], index: 4, kind: input, shape index: {}]
  %s5 = inlined_call_operand.vmem [shape: f32[1,32], index: 5, kind: input, shape index: {}]
  %s6 = inlined_call_operand.vmem [shape: f32[1,32], index: 6, kind: input, shape index: {}]
  %s7 = inlined_call_operand.hbm [shape: f32[16,32], index: 7, kind: output, shape index: {}]
  %s8 = sld [smem:[#allocation0]]
  $region46: #{transformer_sentence_encoder_layer_forward.7} parent=0
    _
  %s10 = ssub.s32 1, %s8
  %s11 = scalar_select 0, %s10, %s8
  $region1: #{transformer_sentence_encoder_layer_forward.7} parent=0
    #allocation3 [shape = 'u8[8192]{0}', space=vmem, size = 0x2000, scoped, tag = 'output window, operand 0, single buffered']
    #allocation4 [shape = 's32[1]{0}', space=sflag, size = 0x4, scoped, tag = 'scoped memory for transformer_sentence_encoder_layer_forward.7']
    %12 = vsyncpa [#allocation4], 0
    // Predicated region
    $region2: #{transformer_sentence_encoder_layer_forward.7} parent=1 // pred_check
      _
    $region3: #{transformer_sentence_encoder_layer_forward.7} parent=1 // pred_check_branch
      %14 = sbr.rel (0) target = $region5
    $region4: #{transformer_sentence_encoder_layer_forward.7} parent=1 // pred_region
      _
    $region5: #{transformer_sentence_encoder_layer_forward.7} parent=1 // pred_fallthru
      _
    // Predicated region
    $region6: #{transformer_sentence_encoder_layer_forward.7} parent=1 // pred_check
      _
    $region7: #{transformer_sentence_encoder_layer_forward.7} parent=1 // pred_check_branch
      %16 = sbr.rel (0) target = $region9
    $region8: #{transformer_sentence_encoder_layer_forward.7} parent=1 // pred_region
      _
    $region9: #{transformer_sentence_encoder_layer_forward.7} parent=1 // pred_fallthru
      _
    // Predicated region
    $region10: #{transformer_sentence_encoder_layer_forward.7} parent=1 // pred_check
      _
    $region11: #{transformer_sentence_encoder_layer_forward.7} parent=1 // pred_check_branch
      %18 = sbr.rel (0) target = $region13
    $region12: #{transformer_sentence_encoder_layer_forward.7} parent=1 // pred_region
      _
    $region13: #{transformer_sentence_encoder_layer_forward.7} parent=1 // pred_fallthru
      _
    // Predicated region
    $region14: #{transformer_sentence_encoder_layer_forward.7} parent=1 // pred_check
      _
    $region15: #{transformer_sentence_encoder_layer_forward.7} parent=1 // pred_check_branch
      %20 = sbr.rel (0) target = $region17
    $region16: #{transformer_sentence_encoder_layer_forward.7} parent=1 // pred_region
      _
    $region17: #{transformer_sentence_encoder_layer_forward.7} parent=1 // pred_fallthru
      _
    // Predicated region
    $region18: #{transformer_sentence_encoder_layer_forward.7} parent=1 // pred_check
      _
    $region19: #{transformer_sentence_encoder_layer_forward.7} parent=1 // pred_check_branch
      %22 = sbr.rel (0) target = $region21
    $region20: #{transformer_sentence_encoder_layer_forward.7} parent=1 // pred_region
      _
    $region21: #{transformer_sentence_encoder_layer_forward.7} parent=1 // pred_fallthru
      _
    // Predicated region
    $region22: #{transformer_sentence_encoder_layer_forward.7} parent=1 // pred_check
      _
    $region23: #{transformer_sentence_encoder_layer_forward.7} parent=1 // pred_check_branch
      %24 = sbr.rel (0) target = $region25
    $region24: #{transformer_sentence_encoder_layer_forward.7} parent=1 // pred_region
      _
    $region25: #{transformer_sentence_encoder_layer_forward.7} parent=1 // pred_fallthru
      _
    // Predicated region
    $region26: #{transformer_sentence_encoder_layer_forward.7} parent=1 // pred_check
      _
    $region27: #{transformer_sentence_encoder_layer_forward.7} parent=1 // pred_check_branch
      %26 = sbr.rel (0) target = $region29
    $region28: #{transformer_sentence_encoder_layer_forward.7} parent=1 // pred_region
      _
    $region29: #{transformer_sentence_encoder_layer_forward.7} parent=1 // pred_fallthru
      _
    %p28 = scmp.eq.s32.totalorder 0, 0
    // Predicated region
    $region30: #{transformer_sentence_encoder_layer_forward.7} parent=1 // pred_check
      %p29 = pneg %p28
    $region31: #{transformer_sentence_encoder_layer_forward.7} parent=1 // pred_check_branch
      %31 = sbr.rel (%p29) target = $region33
    $region32: #{transformer_sentence_encoder_layer_forward.7} parent=1 // pred_region
      %vm32 = vcmask 261120
      %33 = vst.msk [vmem:[#allocation2] sm:$0xff] %vm32, 0.0
      %34 = vst.msk [vmem:[#allocation2 + $0x8] sm:$0xff] %vm32, 0.0
    $region33: #{transformer_sentence_encoder_layer_forward.7} parent=1 // pred_fallthru
      _
    %v35 = vld [vmem:[%s0] sm:$0xff]
    %v36 = vld [vmem:[%s0 + $0x8] sm:$0xff]
    %v37 = vpack.c.bf16 %v36, %v35
    %v38 = vld [vmem:[%s1] sm:$0xf]
    %v39 = vld [vmem:[%s1 + $0x4] sm:$0xf]
    %v40 = vld [vmem:[%s1 + $0x8] sm:$0xf]
    %v41 = vld [vmem:[%s1 + $0xc] sm:$0xf]
    %v42 = vld [vmem:[%s2] sm:$0x1]
    %v44 = vperm.slane %v42, 0
    %v50 = vunpack.c.l.b16 %v38
    %v51 = vunpack.c.l.b16 %v39
    %v52 = vunpack.c.l.b16 %v40
    %v53 = vunpack.c.l.b16 %v41
    %v54 = vpack.c.b16 %v51, %v50
    %v55 = vpack.c.b16 %v53, %v52
    %vm58 = vcmask 261120
    %v60 = vsel %vm58, %v37, 0
    %62 = vmatpush.bf16.msra.mxu0 0
    %63 = vmatpush.bf16.msra.mxu0 0
    %64 = vmatpush.bf16.msra.mxu0 0
    %65 = vmatpush.bf16.msra.mxu0 0
    %66 = vmatpush.bf16.msra.mxu0 0
    %67 = vmatpush.bf16.msra.mxu0 0
    %68 = vmatpush.bf16.msra.mxu0 %v55
    %69 = vmatpush.bf16.msra.mxu0 %v54
    %70 = vmatmul.bf16.gmra.mxu0 %v60
    %v71 = vpop.f32.mrf.mxu0
    %v72 = vadd.f32 %v44, %v71
    %v73 = vpop.f32.mrf.mxu0
    %v74 = vadd.f32 %v44, %v73
    %75 = vdwg.mxu0
    %v76 = vmax.f32 %v72, 0.0
    %v77 = vmax.f32 %v74, 0.0
    %v78 = vld [vmem:[#allocation2] sm:$0xff]
    %v79 = vld [vmem:[#allocation2 + $0x8] sm:$0xff]
    %v80 = vpack.c.bf16 %v77, %v76
    %v81 = vld [vmem:[%s3] sm:$0xf]
    %v82 = vld [vmem:[%s3 + $0x4] sm:$0xf]
    %v83 = vld [vmem:[%s3 + $0x8] sm:$0xf]
    %v84 = vld [vmem:[%s3 + $0xc] sm:$0xf]
    %v85 = vld [vmem:[%s3 + $0x10] sm:$0xf]
    %v86 = vld [vmem:[%s3 + $0x14] sm:$0xf]
    %v87 = vld [vmem:[%s3 + $0x18] sm:$0xf]
    %v88 = vld [vmem:[%s3 + $0x1c] sm:$0xf]
    %v97 = vunpack.c.l.b16 %v81
    %v98 = vunpack.c.l.b16 %v82
    %v99 = vunpack.c.l.b16 %v83
    %v100 = vunpack.c.l.b16 %v84
    %v101 = vunpack.c.l.b16 %v85
    %v102 = vunpack.c.l.b16 %v86
    %v103 = vunpack.c.l.b16 %v87
    %v104 = vunpack.c.l.b16 %v88
    %v105 = vpack.c.b16 %v98, %v97
    %v106 = vpack.c.b16 %v100, %v99
    %v107 = vpack.c.b16 %v102, %v101
    %v108 = vpack.c.b16 %v104, %v103
    %vm113 = vcmask 523264
    %v115 = vsel %vm113, %v80, 0
    %117 = vmatpush.bf16.msra.mxu0 0
    %118 = vmatpush.bf16.msra.mxu0 0
    %119 = vmatpush.bf16.msra.mxu0 0
    %120 = vmatpush.bf16.msra.mxu0 0
    %121 = vmatpush.bf16.msra.mxu0 %v108
    %122 = vmatpush.bf16.msra.mxu0 %v107
    %123 = vmatpush.bf16.msra.mxu0 %v106
    %124 = vmatpush.bf16.msra.mxu0 %v105
    %125 = vmatmul.bf16.gmra.mxu0 %v115
    %v126 = vpop.f32.mrf.mxu0
    %v127 = vadd.f32 0.0, %v126
    %v128 = vpop.f32.mrf.mxu0
    %v129 = vadd.f32 0.0, %v128
    %130 = vdwg.mxu0
    %v131 = vadd.f32 %v78, %v127
    %v132 = vadd.f32 %v79, %v129
    %133 = vst.msk [vmem:[#allocation2] sm:$0xff] %vm58, %v131
    %134 = vst.msk [vmem:[#allocation2 + $0x8] sm:$0xff] %vm58, %v132
    // Predicated region
    $region34: #{transformer_sentence_encoder_layer_forward.7} parent=1 // pred_check
      %p135 = pneg %p28
    $region35: #{transformer_sentence_encoder_layer_forward.7} parent=1 // pred_check_branch
      %137 = sbr.rel (%p135) target = $region37
    $region36: #{transformer_sentence_encoder_layer_forward.7} parent=1 // pred_region
      %v138 = vld [vmem:[#allocation2] sm:$0xff]
      %v139 = vld [vmem:[#allocation2 + $0x8] sm:$0xff]
      %v140 = vadd.f32 %v35, %v138
      %v141 = vadd.f32 %v36, %v139
      %v142 = vld [vmem:[%s4] sm:$0x1]
      %v144 = vperm.slane %v142, 0
      %v146 = vadd.f32 %v140, %v144
      %v147 = vadd.f32 %v141, %v144
      %v148 = vld [vmem:[%s5] sm:$0x1]
      %v149 = vld [vmem:[%s6] sm:$0x1]
      %v150 = vsel %vm58, %v146, 0.0
      %151 = vadd.xlane.f32.xlu0 %v150
      %v152 = vpop.xlane.xlu0 %151
      %v153 = vsel %vm58, %v147, 0.0
      %154 = vadd.xlane.f32.xlu0 %v153
      %v155 = vpop.xlane.xlu0 %154
      %v156 = vrcp.pop 32.0
      %v157 = vmul.f32 32.0, %v156
      %v158 = vsub.f32 1.0, %v157
      %v159 = vmul.f32 %v156, %v158
      %v160 = vadd.f32 %v156, %v159
      %vm161 = vweird.f32 %v156
      %v162 = vsel %vm161, %v156, %v160
      %v163 = vmul.f32 %v152, %v162
      %v164 = vmul.f32 %v155, %v162
      %v165 = vsub.f32 %v146, %v163
      %v166 = vsub.f32 %v147, %v164
      %v167 = vmul.f32 %v165, %v165
      %v168 = vmul.f32 %v166, %v166
      %v169 = vsel %vm58, %v167, 0.0
      %170 = vadd.xlane.f32.xlu0 %v169
      %v171 = vpop.xlane.xlu0 %170
      %v172 = vsel %vm58, %v168, 0.0
      %173 = vadd.xlane.f32.xlu0 %v172
      %v174 = vpop.xlane.xlu0 %173
      %v175 = vmul.f32 %v171, %v162
      %v176 = vmul.f32 %v174, %v162
      %v177 = vadd.f32 %v175, 1e-05
      %v178 = vadd.f32 %v176, 1e-05
      %v179 = vrsqrt.pop %v177
      %v180 = vmul.f32 %v179, %v177
      %v181 = vmul.f32 %v180, %v179
      %v182 = vmul.f32 0.5, %v181
      %v183 = vsub.f32 1.5, %v182
      %v184 = vmul.f32 %v179, %v183
      %vm185 = vweird.f32 %v177
      %vm186 = vweird.f32 %v179
      %vm187 = vmor %vm185, %vm186
      %v188 = vsel %vm187, %v179, %v184
      %v189 = vrsqrt.pop %v178
      %v190 = vmul.f32 %v189, %v178
      %v191 = vmul.f32 %v190, %v189
      %v192 = vmul.f32 0.5, %v191
      %v193 = vsub.f32 1.5, %v192
      %v194 = vmul.f32 %v189, %v193
      %vm195 = vweird.f32 %v178
      %vm196 = vweird.f32 %v189
      %vm197 = vmor %vm195, %vm196
      %v198 = vsel %vm197, %v189, %v194
      %v199 = vmul.f32 %v165, %v188
      %v200 = vmul.f32 %v166, %v198
      %v202 = vperm.slane %v148, 0
      %v204 = vmul.f32 %v199, %v202
      %v205 = vmul.f32 %v200, %v202
      %v207 = vperm.slane %v149, 0
      %v209 = vadd.f32 %v204, %v207
      %v210 = vadd.f32 %v205, %v207
      %211 = vst.msk [vmem:[#allocation3] sm:$0xff] %vm58, %v209
      %212 = vst.msk [vmem:[#allocation3 + $0x8] sm:$0xff] %vm58, %v210
    $region37: #{transformer_sentence_encoder_layer_forward.7} parent=1 // pred_fallthru
      _
    // Predicated region
    $region38: #{transformer_sentence_encoder_layer_forward.7} parent=1 // pred_check
      _
    $region39: #{transformer_sentence_encoder_layer_forward.7} parent=1 // pred_check_branch
      %214 = sbr.rel (0) target = $region41
    $region40: #{transformer_sentence_encoder_layer_forward.7} parent=1 // pred_region
      %216 = vsyncadd [#allocation4], 0
      %s217 = sshll.u32 [#allocation3], 4
      %s218 = int_to_ptr.vmem [resolvable:$true] %s217
      %s219 = sshll.u32 %s7, 4
      %s220 = int_to_ptr.hbm [resolvable:$true] %s219
      %225 = dma.vmem_to_hbm [thread:$0]  %s218, 256, %s220, [#allocation4], 128, 128, 8
    $region41: #{transformer_sentence_encoder_layer_forward.7} parent=1 // pred_fallthru
      _
    // Predicated region
    $region42: #{transformer_sentence_encoder_layer_forward.7} parent=1 // pred_check
      _
    $region43: #{transformer_sentence_encoder_layer_forward.7} parent=1 // pred_check_branch
      %227 = sbr.rel (0) target = $region45
    $region44: #{transformer_sentence_encoder_layer_forward.7} parent=1 // pred_region
      %229 = dma.done [#allocation4], 256
    $region45: #{transformer_sentence_encoder_layer_forward.7} parent=1 // pred_fallthru
      _
    %230 = vsyncpa [#allocation4], 1

// kernel: transformer_sentence_encoder_layer_forward.5
$region0: #{transformer_sentence_encoder_layer_forward.5}
  #allocation0 [shape = 'u32[]', space=smem, size = 0x4, offset = 0x4, fixed_abs, tag = 'smem constant byte address 0x4 - core index']
  #allocation1 [shape = 'u32[72,128]{1,0:T(1,128)}', space=vmem, size = 0x9000, scoped, tag = 'internal scratch']
  %s0 = inlined_call_operand.vmem [shape: bf16[8,2,3,4,8], index: 0, kind: input, shape index: {}]
  %s1 = inlined_call_operand.vmem [shape: bf16[8,2,4,8], index: 1, kind: output, shape index: {}]
  %s2 = sld [smem:[#allocation0]]
  $region115: #{transformer_sentence_encoder_layer_forward.5} parent=0
    _
  %s4 = ssub.s32 1, %s2
  %s5 = scalar_select 0, %s4, %s2
  $region1: #{transformer_sentence_encoder_layer_forward.5} parent=0
    #allocation2 [shape = 'u8[49152]{0}', space=vmem, size = 0xc000, scoped, tag = 'input window, operand 0']
    #allocation3 [shape = 'u8[16384]{0}', space=vmem, size = 0x4000, scoped, tag = 'output window, operand 0']
    loop: start=0, step=1, limit=4
    $region2: #{transformer_sentence_encoder_layer_forward.5} parent=1 // loop_pre_header
      _
    $region3: #{transformer_sentence_encoder_layer_forward.5} parent=1 // loop_header
      %s7 = sphi 0, %s11
      %p8 = scmp.ge.s32.totalorder %s7, 4
      %s17 = sphi 0, %s19
      %s20 = sphi 0, %s17
      %s21 = sphi 0, %s20
      %s37 = sphi 0, %s21
      %s43 = sphi 0, %s45
      %s46 = sphi 0, %s43
      %s47 = sphi 0, %s46
      %s63 = sphi 0, %s47
    $region4: #{transformer_sentence_encoder_layer_forward.5} parent=1 // loop_header_branch
      %10 = sbr.rel (%p8) target = $region8
    $region5: #{transformer_sentence_encoder_layer_forward.5} parent=1 // loop_body
      %s12 = ssub.s32 %s7, 1
      %s13 = ssub.s32 %s7, 2
      %s14 = sadd.s32 %s7, 1
      %s15 = ssub.s32 %s7, %s14
      %p16 = scmp.eq.s32.totalorder %s15, 0
      %s18 = sadd.s32 %s17, 1
      %s19 = scalar_select %p16, %s17, %s18
      %p22 = pneg %p16
      %p23 = scmp.eq.s32.totalorder %s7, 1
      %p24 = por %p22, %p23
      %p25 = scmp.ne.s32.totalorder %s17, %s20
      %p26 = scmp.eq.s32.totalorder %s7, 0
      %p27 = por %p25, %p26
      %p28 = scmp.ne.s32.totalorder %s17, %s20
      %p29 = scmp.eq.s32.totalorder %s12, 1
      %p30 = por %p28, %p29
      %p31 = scmp.ne.s32.totalorder %s20, %s21
      %p32 = scmp.eq.s32.totalorder %s12, 0
      %p33 = por %p31, %p32
      %p34 = scmp.ne.s32.totalorder %s20, %s21
      %p35 = scmp.eq.s32.totalorder %s13, 1
      %p36 = por %p34, %p35
      %p38 = scmp.ne.s32.totalorder %s21, %s37
      %p39 = scmp.eq.s32.totalorder %s13, 0
      %p40 = por %p38, %p39
      %s41 = ssub.s32 %s7, %s14
      %p42 = scmp.eq.s32.totalorder %s41, 0
      %s44 = sadd.s32 %s43, 1
      %s45 = scalar_select %p42, %s43, %s44
      %p48 = pneg %p42
      %p49 = scmp.eq.s32.totalorder %s7, 1
      %p50 = por %p48, %p49
      %p51 = scmp.ne.s32.totalorder %s43, %s46
      %p52 = scmp.eq.s32.totalorder %s7, 0
      %p53 = por %p51, %p52
      %p54 = scmp.ne.s32.totalorder %s43, %s46
      %p55 = scmp.eq.s32.totalorder %s12, 1
      %p56 = por %p54, %p55
      %p57 = scmp.ne.s32.totalorder %s46, %s47
      %p58 = scmp.eq.s32.totalorder %s12, 0
      %p59 = por %p57, %p58
      %p60 = scmp.ne.s32.totalorder %s46, %s47
      %p61 = scmp.eq.s32.totalorder %s13, 1
      %p62 = por %p60, %p61
      %p64 = scmp.ne.s32.totalorder %s47, %s63
      %p65 = scmp.eq.s32.totalorder %s13, 0
      %p66 = por %p64, %p65
      %p67 = scmp.le.s32.totalorder 1, %s7
      %p68 = scmp.lt.s32.totalorder %s7, 3
      %p69 = pnand %p67, %p68
      %p70 = pneg %p69
      // Predicated region
      $region9: #{transformer_sentence_encoder_layer_forward.5} parent=5 // pred_check
        _
      $region10: #{transformer_sentence_encoder_layer_forward.5} parent=5 // pred_check_branch
        %72 = sbr.rel (%p69) target = $region12
      $region11: #{transformer_sentence_encoder_layer_forward.5} parent=5 // pred_region
        %s73 = ssub.s32 %s7, 1
      $region12: #{transformer_sentence_encoder_layer_forward.5} parent=5 // pred_fallthru
        _
      %p74 = scmp.lt.s32.totalorder %s7, 2
      // Predicated region
      $region13: #{transformer_sentence_encoder_layer_forward.5} parent=5 // pred_check
        %p75 = pneg %p74
      $region14: #{transformer_sentence_encoder_layer_forward.5} parent=5 // pred_check_branch
        %77 = sbr.rel (%p75) target = $region16
      $region15: #{transformer_sentence_encoder_layer_forward.5} parent=5 // pred_region
        // Predicated region
        $region17: #{transformer_sentence_encoder_layer_forward.5} parent=15 // pred_check
          %p78 = pneg %p27
        $region18: #{transformer_sentence_encoder_layer_forward.5} parent=15 // pred_check_branch
          %80 = sbr.rel (%p78) target = $region20
        $region19: #{transformer_sentence_encoder_layer_forward.5} parent=15 // pred_region
          %s81 = sand.u32 %s17, 1
          %s82 = sand.u32 %s17, 1
          %s83 = smul.addr %s82, 48
          %s84 = scalar_lea.vmem [#allocation2], %s83
          %s85 = smul.addr %s7, 3
          %s86 = smul.addr %s85, 2
          %s87 = scalar_lea.vmem %s0, %s86
          // Predicated region
          $region21: #{transformer_sentence_encoder_layer_forward.5} parent=19 // pred_check
            _
          $region22: #{transformer_sentence_encoder_layer_forward.5} parent=19 // pred_check_branch
            %89 = sbr.rel (0) target = $region24
          $region23: #{transformer_sentence_encoder_layer_forward.5} parent=19 // pred_region
            // Predicated region
            $region25: #{transformer_sentence_encoder_layer_forward.5} parent=23 // pred_check
              _
            $region26: #{transformer_sentence_encoder_layer_forward.5} parent=23 // pred_check_branch
              %91 = sbr.rel target = $region28
            $region27: #{transformer_sentence_encoder_layer_forward.5} parent=23 // pred_region
              // Predicated region
              $region40: #{transformer_sentence_encoder_layer_forward.5} parent=27 // pred_check
                _
              $region41: #{transformer_sentence_encoder_layer_forward.5} parent=27 // pred_check_branch
                %153 = sbr.rel (0) target = $region43
              $region42: #{transformer_sentence_encoder_layer_forward.5} parent=27 // pred_region
                loop: start=0, step=1, limit=1
                $region44: #{transformer_sentence_encoder_layer_forward.5} parent=42 // loop_pre_header
                  _
                $region45: #{transformer_sentence_encoder_layer_forward.5} parent=42 // loop_header
                  %s155 = sphi 0, %s159
                  %p156 = scmp.ge.s32.totalorder %s155, 1
                  %s160 = sphi %s87, %s87
                  %s161 = sphi %s84, %s84
                $region46: #{transformer_sentence_encoder_layer_forward.5} parent=42 // loop_header_branch
                  %158 = sbr.rel (%p156) target = $region50
                $region47: #{transformer_sentence_encoder_layer_forward.5} parent=42 // loop_body
                  _
                $region48: #{transformer_sentence_encoder_layer_forward.5} parent=42 // loop_footer
                  %s159 = sadd.s32 1, %s155
                $region49: #{transformer_sentence_encoder_layer_forward.5} parent=42 // loop_footer_branch
                  %154 = sbr.rel target = $region45
                $region50: #{transformer_sentence_encoder_layer_forward.5} parent=42 // loop_exit
                  _
                %s163 = ssub.s32 4, 1
                loop: start=0, step=1, limit=1
                $region51: #{transformer_sentence_encoder_layer_forward.5} parent=42 // loop_pre_header
                  _
                $region52: #{transformer_sentence_encoder_layer_forward.5} parent=42 // loop_header
                  %s165 = sphi 0, %s169
                  %p166 = scmp.ge.s32.totalorder %s165, 1
                  %s170 = sphi %s87, %s87
                  %s171 = sphi %s84, %s84
                $region53: #{transformer_sentence_encoder_layer_forward.5} parent=42 // loop_header_branch
                  %168 = sbr.rel (%p166) target = $region57
                $region54: #{transformer_sentence_encoder_layer_forward.5} parent=42 // loop_body
                  %v172 = vld [vmem:[%s170] sm:%s163]
                  %173 = vst [vmem:[%s171] sm:%s163] %v172
                  %v174 = vld [vmem:[%s170 + $0x2] sm:%s163]
                  %175 = vst [vmem:[%s171 + $0x2] sm:%s163] %v174
                  %v176 = vld [vmem:[%s170 + $0x4] sm:%s163]
                  %177 = vst [vmem:[%s171 + $0x4] sm:%s163] %v176
                  %v178 = vld [vmem:[%s170 + $0xc] sm:%s163]
                  %179 = vst [vmem:[%s171 + $0x6] sm:%s163] %v178
                  %v180 = vld [vmem:[%s170 + $0xe] sm:%s163]
                  %181 = vst [vmem:[%s171 + $0x8] sm:%s163] %v180
                  %v182 = vld [vmem:[%s170 + $0x10] sm:%s163]
                  %183 = vst [vmem:[%s171 + $0xa] sm:%s163] %v182
                  %v184 = vld [vmem:[%s170 + $0x18] sm:%s163]
                  %185 = vst [vmem:[%s171 + $0xc] sm:%s163] %v184
                  %v186 = vld [vmem:[%s170 + $0x1a] sm:%s163]
                  %187 = vst [vmem:[%s171 + $0xe] sm:%s163] %v186
                  %v188 = vld [vmem:[%s170 + $0x1c] sm:%s163]
                  %189 = vst [vmem:[%s171 + $0x10] sm:%s163] %v188
                  %v190 = vld [vmem:[%s170 + $0x24] sm:%s163]
                  %191 = vst [vmem:[%s171 + $0x12] sm:%s163] %v190
                  %v192 = vld [vmem:[%s170 + $0x26] sm:%s163]
                  %193 = vst [vmem:[%s171 + $0x14] sm:%s163] %v192
                  %v194 = vld [vmem:[%s170 + $0x28] sm:%s163]
                  %195 = vst [vmem:[%s171 + $0x16] sm:%s163] %v194
                  %v196 = vld [vmem:[%s170 + $0x30] sm:%s163]
                  %197 = vst [vmem:[%s171 + $0x18] sm:%s163] %v196
                  %v198 = vld [vmem:[%s170 + $0x32] sm:%s163]
                  %199 = vst [vmem:[%s171 + $0x1a] sm:%s163] %v198
                  %v200 = vld [vmem:[%s170 + $0x34] sm:%s163]
                  %201 = vst [vmem:[%s171 + $0x1c] sm:%s163] %v200
                  %v202 = vld [vmem:[%s170 + $0x3c] sm:%s163]
                  %203 = vst [vmem:[%s171 + $0x1e] sm:%s163] %v202
                  %v204 = vld [vmem:[%s170 + $0x3e] sm:%s163]
                  %205 = vst [vmem:[%s171 + $0x20] sm:%s163] %v204
                  %v206 = vld [vmem:[%s170 + $0x40] sm:%s163]
                  %207 = vst [vmem:[%s171 + $0x22] sm:%s163] %v206
                  %v208 = vld [vmem:[%s170 + $0x48] sm:%s163]
                  %209 = vst [vmem:[%s171 + $0x24] sm:%s163] %v208
                  %v210 = vld [vmem:[%s170 + $0x4a] sm:%s163]
                  %211 = vst [vmem:[%s171 + $0x26] sm:%s163] %v210
                  %v212 = vld [vmem:[%s170 + $0x4c] sm:%s163]
                  %213 = vst [vmem:[%s171 + $0x28] sm:%s163] %v212
                  %v214 = vld [vmem:[%s170 + $0x54] sm:%s163]
                  %215 = vst [vmem:[%s171 + $0x2a] sm:%s163] %v214
                  %v216 = vld [vmem:[%s170 + $0x56] sm:%s163]
                  %217 = vst [vmem:[%s171 + $0x2c] sm:%s163] %v216
                  %v218 = vld [vmem:[%s170 + $0x58] sm:%s163]
                  %219 = vst [vmem:[%s171 + $0x2e] sm:%s163] %v218
                $region55: #{transformer_sentence_encoder_layer_forward.5} parent=42 // loop_footer
                  %s169 = sadd.s32 1, %s165
                $region56: #{transformer_sentence_encoder_layer_forward.5} parent=42 // loop_footer_branch
                  %164 = sbr.rel target = $region52
                $region57: #{transformer_sentence_encoder_layer_forward.5} parent=42 // loop_exit
                  _
              $region43: #{transformer_sentence_encoder_layer_forward.5} parent=27 // pred_fallthru
                _
            $region28: #{transformer_sentence_encoder_layer_forward.5} parent=23 // pred_fallthru
              _
            // Predicated region
            $region29: #{transformer_sentence_encoder_layer_forward.5} parent=23 // pred_check
              _
            $region30: #{transformer_sentence_encoder_layer_forward.5} parent=23 // pred_check_branch
              %93 = sbr.rel (0) target = $region32
            $region31: #{transformer_sentence_encoder_layer_forward.5} parent=23 // pred_region
              %s95 = ssub.s32 4, 1
              loop: start=0, step=1, limit=1
              $region33: #{transformer_sentence_encoder_layer_forward.5} parent=31 // loop_pre_header
                _
              $region34: #{transformer_sentence_encoder_layer_forward.5} parent=31 // loop_header
                %s97 = sphi 0, %s101
                %p98 = scmp.ge.s32.totalorder %s97, 1
                %s102 = sphi %s87, %s87
                %s103 = sphi %s84, %s84
              $region35: #{transformer_sentence_encoder_layer_forward.5} parent=31 // loop_header_branch
                %100 = sbr.rel (%p98) target = $region39
              $region36: #{transformer_sentence_encoder_layer_forward.5} parent=31 // loop_body
                %v104 = vld [vmem:[%s102] sm:%s95]
                %105 = vst [vmem:[%s103] sm:%s95] %v104
                %v106 = vld [vmem:[%s102 + $0x2] sm:%s95]
                %107 = vst [vmem:[%s103 + $0x2] sm:%s95] %v106
                %v108 = vld [vmem:[%s102 + $0x4] sm:%s95]
                %109 = vst [vmem:[%s103 + $0x4] sm:%s95] %v108
                %v110 = vld [vmem:[%s102 + $0xc] sm:%s95]
                %111 = vst [vmem:[%s103 + $0x6] sm:%s95] %v110
                %v112 = vld [vmem:[%s102 + $0xe] sm:%s95]
                %113 = vst [vmem:[%s103 + $0x8] sm:%s95] %v112
                %v114 = vld [vmem:[%s102 + $0x10] sm:%s95]
                %115 = vst [vmem:[%s103 + $0xa] sm:%s95] %v114
                %v116 = vld [vmem:[%s102 + $0x18] sm:%s95]
                %117 = vst [vmem:[%s103 + $0xc] sm:%s95] %v116
                %v118 = vld [vmem:[%s102 + $0x1a] sm:%s95]
                %119 = vst [vmem:[%s103 + $0xe] sm:%s95] %v118
                %v120 = vld [vmem:[%s102 + $0x1c] sm:%s95]
                %121 = vst [vmem:[%s103 + $0x10] sm:%s95] %v120
                %v122 = vld [vmem:[%s102 + $0x24] sm:%s95]
                %123 = vst [vmem:[%s103 + $0x12] sm:%s95] %v122
                %v124 = vld [vmem:[%s102 + $0x26] sm:%s95]
                %125 = vst [vmem:[%s103 + $0x14] sm:%s95] %v124
                %v126 = vld [vmem:[%s102 + $0x28] sm:%s95]
                %127 = vst [vmem:[%s103 + $0x16] sm:%s95] %v126
                %v128 = vld [vmem:[%s102 + $0x30] sm:%s95]
                %129 = vst [vmem:[%s103 + $0x18] sm:%s95] %v128
                %v130 = vld [vmem:[%s102 + $0x32] sm:%s95]
                %131 = vst [vmem:[%s103 + $0x1a] sm:%s95] %v130
                %v132 = vld [vmem:[%s102 + $0x34] sm:%s95]
                %133 = vst [vmem:[%s103 + $0x1c] sm:%s95] %v132
                %v134 = vld [vmem:[%s102 + $0x3c] sm:%s95]
                %135 = vst [vmem:[%s103 + $0x1e] sm:%s95] %v134
                %v136 = vld [vmem:[%s102 + $0x3e] sm:%s95]
                %137 = vst [vmem:[%s103 + $0x20] sm:%s95] %v136
                %v138 = vld [vmem:[%s102 + $0x40] sm:%s95]
                %139 = vst [vmem:[%s103 + $0x22] sm:%s95] %v138
                %v140 = vld [vmem:[%s102 + $0x48] sm:%s95]
                %141 = vst [vmem:[%s103 + $0x24] sm:%s95] %v140
                %v142 = vld [vmem:[%s102 + $0x4a] sm:%s95]
                %143 = vst [vmem:[%s103 + $0x26] sm:%s95] %v142
                %v144 = vld [vmem:[%s102 + $0x4c] sm:%s95]
                %145 = vst [vmem:[%s103 + $0x28] sm:%s95] %v144
                %v146 = vld [vmem:[%s102 + $0x54] sm:%s95]
                %147 = vst [vmem:[%s103 + $0x2a] sm:%s95] %v146
                %v148 = vld [vmem:[%s102 + $0x56] sm:%s95]
                %149 = vst [vmem:[%s103 + $0x2c] sm:%s95] %v148
                %v150 = vld [vmem:[%s102 + $0x58] sm:%s95]
                %151 = vst [vmem:[%s103 + $0x2e] sm:%s95] %v150
              $region37: #{transformer_sentence_encoder_layer_forward.5} parent=31 // loop_footer
                %s101 = sadd.s32 1, %s97
              $region38: #{transformer_sentence_encoder_layer_forward.5} parent=31 // loop_footer_branch
                %96 = sbr.rel target = $region34
              $region39: #{transformer_sentence_encoder_layer_forward.5} parent=31 // loop_exit
                _
            $region32: #{transformer_sentence_encoder_layer_forward.5} parent=23 // pred_fallthru
              _
          $region24: #{transformer_sentence_encoder_layer_forward.5} parent=19 // pred_fallthru
            _
          %220 = vnop
        $region20: #{transformer_sentence_encoder_layer_forward.5} parent=15 // pred_fallthru
          _
      $region16: #{transformer_sentence_encoder_layer_forward.5} parent=5 // pred_fallthru
        _
      %p221 = scmp.le.s32.totalorder 1, %s7
      %p222 = scmp.lt.s32.totalorder %s7, 3
      %p223 = pnand %p221, %p222
      %p224 = pneg %p223
      // Predicated region
      $region58: #{transformer_sentence_encoder_layer_forward.5} parent=5 // pred_check
        _
      $region59: #{transformer_sentence_encoder_layer_forward.5} parent=5 // pred_check_branch
        %226 = sbr.rel (%p223) target = $region61
      $region60: #{transformer_sentence_encoder_layer_forward.5} parent=5 // pred_region
        %s227 = ssub.s32 %s7, 1
        %s228 = sand.u32 %s20, 1
        %s229 = sand.u32 %s20, 1
        %s230 = smul.addr %s229, 48
        %s231 = scalar_lea.vmem [#allocation2], %s230
        // Predicated region
        $region62: #{transformer_sentence_encoder_layer_forward.5} parent=60 // pred_check
          %p232 = pneg %p33
        $region63: #{transformer_sentence_encoder_layer_forward.5} parent=60 // pred_check_branch
          %234 = sbr.rel (%p232) target = $region65
        $region64: #{transformer_sentence_encoder_layer_forward.5} parent=60 // pred_region
          _
        $region65: #{transformer_sentence_encoder_layer_forward.5} parent=60 // pred_fallthru
          _
        %s235 = sand.u32 %s20, 1
        %s236 = sand.u32 %s20, 1
        %s237 = smul.addr %s236, 48
        %s238 = scalar_lea.vmem [#allocation2], %s237
        %p239 = pneg %p33
        %p240 = pneg %p30
        %p241 = pneg %p59
        %p242 = pneg %p56
        %s243 = sand.u32 %s46, 1
        %s244 = sand.u32 %s46, 1
        %s245 = smul.addr %s244, 16
        %s246 = scalar_lea.vmem [#allocation3], %s245
        %v248 = vld [vmem:[%s231] sm:$0x1]
        %v249 = vld [vmem:[%s231 + $0x6] sm:$0x1]
        %v250 = vld [vmem:[%s231 + $0xc] sm:$0x1]
        %v251 = vld [vmem:[%s231 + $0x12] sm:$0x1]
        %v252 = vld [vmem:[%s231 + $0x18] sm:$0x1]
        %v253 = vld [vmem:[%s231 + $0x1e] sm:$0x1]
        %v254 = vld [vmem:[%s231 + $0x24] sm:$0x1]
        %v255 = vld [vmem:[%s231 + $0x2a] sm:$0x1]
        %s256 = scalar_lea.vmem %s231, 2 [#allocation2]
        %v257 = vld [vmem:[%s256] sm:$0x1]
        %v258 = vld [vmem:[%s256 + $0x6] sm:$0x1]
        %v259 = vld [vmem:[%s256 + $0xc] sm:$0x1]
        %v260 = vld [vmem:[%s256 + $0x12] sm:$0x1]
        %v261 = vld [vmem:[%s256 + $0x18] sm:$0x1]
        %v262 = vld [vmem:[%s256 + $0x1e] sm:$0x1]
        %v263 = vld [vmem:[%s256 + $0x24] sm:$0x1]
        %v264 = vld [vmem:[%s256 + $0x2a] sm:$0x1]
        %s265 = scalar_lea.vmem %s231, 4 [#allocation2]
        %v266 = vld [vmem:[%s265] sm:$0x1]
        %v267 = vld [vmem:[%s265 + $0x6] sm:$0x1]
        %v268 = vld [vmem:[%s265 + $0xc] sm:$0x1]
        %v269 = vld [vmem:[%s265 + $0x12] sm:$0x1]
        %v270 = vld [vmem:[%s265 + $0x18] sm:$0x1]
        %v271 = vld [vmem:[%s265 + $0x1e] sm:$0x1]
        %v272 = vld [vmem:[%s265 + $0x24] sm:$0x1]
        %v273 = vld [vmem:[%s265 + $0x2a] sm:$0x1]
        %275 = vst [vmem:[#allocation1] ss:$4 sm:$0xff] %v248
        %v276 = vld.sshfl [vmem:[#allocation1] sm:$0xff pattern:$0x73625140]
        %s279 = scalar_lea.vmem [#allocation1], 32
        %280 = vst [vmem:[%s279] ss:$4 sm:$0xff] %v249
        %v281 = vld.sshfl [vmem:[#allocation1 + $0x20] sm:$0xff pattern:$0x73625140]
        %284 = vst [vmem:[#allocation1] ss:$4 sm:$0xff] %v250
        %v285 = vld.sshfl [vmem:[#allocation1] sm:$0xff pattern:$0x73625140]
        %288 = vst [vmem:[%s279] ss:$4 sm:$0xff] %v251
        %v289 = vld.sshfl [vmem:[#allocation1 + $0x20] sm:$0xff pattern:$0x73625140]
        %292 = vst [vmem:[#allocation1] ss:$4 sm:$0xff] %v252
        %v293 = vld.sshfl [vmem:[#allocation1] sm:$0xff pattern:$0x73625140]
        %296 = vst [vmem:[%s279] ss:$4 sm:$0xff] %v253
        %v297 = vld.sshfl [vmem:[#allocation1 + $0x20] sm:$0xff pattern:$0x73625140]
        %300 = vst [vmem:[#allocation1] ss:$4 sm:$0xff] %v254
        %v301 = vld.sshfl [vmem:[#allocation1] sm:$0xff pattern:$0x73625140]
        %304 = vst [vmem:[%s279] ss:$4 sm:$0xff] %v255
        %v305 = vld.sshfl [vmem:[#allocation1 + $0x20] sm:$0xff pattern:$0x73625140]
        %v307 = vunpack.c.l.b16 %v276
        %v308 = vunpack.c.l.b16 %v281
        %v309 = vunpack.c.l.b16 %v285
        %v310 = vunpack.c.l.b16 %v289
        %v311 = vunpack.c.l.b16 %v293
        %v312 = vunpack.c.l.b16 %v297
        %v313 = vunpack.c.l.b16 %v301
        %v314 = vunpack.c.l.b16 %v305
        %v315 = vrot.slane %v308, 7
        %vm316 = vcmask 1041409
        %v317 = vsel %vm316, %v315, %v307
        %v318 = vrot.slane %v309, 6
        %vm319 = vcmask 1042434
        %v320 = vsel %vm319, %v318, %v317
        %v321 = vrot.slane %v310, 5
        %vm322 = vcmask 1043459
        %v323 = vsel %vm322, %v321, %v320
        %v324 = vrot.slane %v311, 4
        %vm325 = vcmask 1044484
        %v326 = vsel %vm325, %v324, %v323
        %v327 = vrot.slane %v312, 3
        %vm328 = vcmask 1045509
        %v329 = vsel %vm328, %v327, %v326
        %v330 = vrot.slane %v313, 2
        %vm331 = vcmask 1046534
        %v332 = vsel %vm331, %v330, %v329
        %v333 = vrot.slane %v314, 1
        %vm334 = vcmask 1047559
        %v335 = vsel %vm334, %v333, %v332
        %v336 = vpack.c.b16 %v335, %v335
        %338 = vst [vmem:[#allocation1] ss:$4 sm:$0xff] %v257
        %v339 = vld.sshfl [vmem:[#allocation1] sm:$0xff pattern:$0x73625140]
        %s342 = scalar_lea.vmem [#allocation1], 32
        %343 = vst [vmem:[%s342] ss:$4 sm:$0xff] %v258
        %v344 = vld.sshfl [vmem:[#allocation1 + $0x20] sm:$0xff pattern:$0x73625140]
        %347 = vst [vmem:[#allocation1] ss:$4 sm:$0xff] %v259
        %v348 = vld.sshfl [vmem:[#allocation1] sm:$0xff pattern:$0x73625140]
        %351 = vst [vmem:[%s342] ss:$4 sm:$0xff] %v260
        %v352 = vld.sshfl [vmem:[#allocation1 + $0x20] sm:$0xff pattern:$0x73625140]
        %355 = vst [vmem:[#allocation1] ss:$4 sm:$0xff] %v261
        %v356 = vld.sshfl [vmem:[#allocation1] sm:$0xff pattern:$0x73625140]
        %359 = vst [vmem:[%s342] ss:$4 sm:$0xff] %v262
        %v360 = vld.sshfl [vmem:[#allocation1 + $0x20] sm:$0xff pattern:$0x73625140]
        %363 = vst [vmem:[#allocation1] ss:$4 sm:$0xff] %v263
        %v364 = vld.sshfl [vmem:[#allocation1] sm:$0xff pattern:$0x73625140]
        %367 = vst [vmem:[%s342] ss:$4 sm:$0xff] %v264
        %v368 = vld.sshfl [vmem:[#allocation1 + $0x20] sm:$0xff pattern:$0x73625140]
        %v370 = vunpack.c.l.b16 %v339
        %v371 = vunpack.c.l.b16 %v344
        %v372 = vunpack.c.l.b16 %v348
        %v373 = vunpack.c.l.b16 %v352
        %v374 = vunpack.c.l.b16 %v356
        %v375 = vunpack.c.l.b16 %v360
        %v376 = vunpack.c.l.b16 %v364
        %v377 = vunpack.c.l.b16 %v368
        %v378 = vrot.slane %v371, 7
        %v379 = vsel %vm316, %v378, %v370
        %v380 = vrot.slane %v372, 6
        %v381 = vsel %vm319, %v380, %v379
        %v382 = vrot.slane %v373, 5
        %v383 = vsel %vm322, %v382, %v381
        %v384 = vrot.slane %v374, 4
        %v385 = vsel %vm325, %v384, %v383
        %v386 = vrot.slane %v375, 3
        %v387 = vsel %vm328, %v386, %v385
        %v388 = vrot.slane %v376, 2
        %v389 = vsel %vm331, %v388, %v387
        %v390 = vrot.slane %v377, 1
        %v391 = vsel %vm334, %v390, %v389
        %v392 = vpack.c.b16 %v391, %v391
        %vm393 = vcmask 64512
        %v395 = vsel %vm393, %v336, 0
        %v398 = vsel %vm393, %v392, 0
        %400 = vmatpush.bf16.xpose.msra.mxu0 0
        %401 = vmatpush.bf16.xpose.msra.mxu0 0
        %402 = vmatpush.bf16.xpose.msra.mxu0 0
        %403 = vmatpush.bf16.xpose.msra.mxu0 0
        %404 = vmatpush.bf16.xpose.msra.mxu0 0
        %405 = vmatpush.bf16.xpose.msra.mxu0 0
        %406 = vmatpush.bf16.xpose.msra.mxu0 0
        %407 = vmatpush.bf16.xpose.msra.mxu0 %v398
        %408 = vmatmul.bf16.gmra.mxu0 %v395
        %v409 = vpop.f32.mrf.mxu0
        %v410 = vadd.f32 0.0, %v409
        %v411 = vpop.f32.mrf.mxu0
        %412 = vdwg.mxu0
        %v413 = vsel %vm393, %v410, -inf
        %414 = vmax.xlane.f32.xlu0 %v413
        %v415 = vpop.xlane.xlu0 %414
        %v416 = vsub.f32 %v410, %v415
        %v417 = vmul.f32 %v416, 1.442695
        %v418 = vpow.pop %v417
        %v419 = vsel %vm393, %v418, 0.0
        %420 = vadd.xlane.f32.xlu0 %v419
        %v421 = vpop.xlane.xlu0 %420
        %v422 = vpack.c.bf16 %v418, %v418
        %424 = vst [vmem:[#allocation1] ss:$4 sm:$0xff] %v266
        %v425 = vld.sshfl [vmem:[#allocation1] sm:$0xff pattern:$0x73625140]
        %s428 = scalar_lea.vmem [#allocation1], 32
        %429 = vst [vmem:[%s428] ss:$4 sm:$0xff] %v267
        %v430 = vld.sshfl [vmem:[#allocation1 + $0x20] sm:$0xff pattern:$0x73625140]
        %433 = vst [vmem:[#allocation1] ss:$4 sm:$0xff] %v268
        %v434 = vld.sshfl [vmem:[#allocation1] sm:$0xff pattern:$0x73625140]
        %437 = vst [vmem:[%s428] ss:$4 sm:$0xff] %v269
        %v438 = vld.sshfl [vmem:[#allocation1 + $0x20] sm:$0xff pattern:$0x73625140]
        %441 = vst [vmem:[#allocation1] ss:$4 sm:$0xff] %v270
        %v442 = vld.sshfl [vmem:[#allocation1] sm:$0xff pattern:$0x73625140]
        %445 = vst [vmem:[%s428] ss:$4 sm:$0xff] %v271
        %v446 = vld.sshfl [vmem:[#allocation1 + $0x20] sm:$0xff pattern:$0x73625140]
        %449 = vst [vmem:[#allocation1] ss:$4 sm:$0xff] %v272
        %v450 = vld.sshfl [vmem:[#allocation1] sm:$0xff pattern:$0x73625140]
        %453 = vst [vmem:[%s428] ss:$4 sm:$0xff] %v273
        %v454 = vld.sshfl [vmem:[#allocation1 + $0x20] sm:$0xff pattern:$0x73625140]
        %v456 = vunpack.c.l.b16 %v425
        %v457 = vunpack.c.l.b16 %v430
        %v458 = vunpack.c.l.b16 %v434
        %v459 = vunpack.c.l.b16 %v438
        %v460 = vunpack.c.l.b16 %v442
        %v461 = vunpack.c.l.b16 %v446
        %v462 = vunpack.c.l.b16 %v450
        %v463 = vunpack.c.l.b16 %v454
        %v464 = vrot.slane %v457, 7
        %v465 = vsel %vm316, %v464, %v456
        %v466 = vrot.slane %v458, 6
        %v467 = vsel %vm319, %v466, %v465
        %v468 = vrot.slane %v459, 5
        %v469 = vsel %vm322, %v468, %v467
        %v470 = vrot.slane %v460, 4
        %v471 = vsel %vm325, %v470, %v469
        %v472 = vrot.slane %v461, 3
        %v473 = vsel %vm328, %v472, %v471
        %v474 = vrot.slane %v462, 2
        %v475 = vsel %vm331, %v474, %v473
        %v476 = vrot.slane %v463, 1
        %v477 = vsel %vm334, %v476, %v475
        %v478 = vpack.c.b16 %v477, %v477
        %v480 = vsel %vm393, %v422, 0
        %vm482 = vcmask 1043456
        %v484 = vsel %vm482, %v478, 0
        %486 = vmatpush.bf16.msra.mxu0 0
        %487 = vmatpush.bf16.msra.mxu0 0
        %488 = vmatpush.bf16.msra.mxu0 0
        %489 = vmatpush.bf16.msra.mxu0 0
        %490 = vmatpush.bf16.msra.mxu0 0
        %491 = vmatpush.bf16.msra.mxu0 0
        %492 = vmatpush.bf16.msra.mxu0 0
        %493 = vmatpush.bf16.msra.mxu0 %v484
        %494 = vmatmul.bf16.gmra.mxu0 %v480
        %v495 = vpop.f32.mrf.mxu0
        %v496 = vadd.f32 0.0, %v495
        %v497 = vpop.f32.mrf.mxu0
        %498 = vdwg.mxu0
        %v499 = vrcp.pop %v421
        %v500 = vmul.f32 %v496, %v499
        %v501 = vpack.c.bf16 %v500, %v500
        %v503 = vrot.slane %v501, 3
        %vm504 = vcmask 1040384
        %v507 = vsel %vm504, %v501, %v503
        %v509 = vsel %vm316, %v501, %v503
        %v511 = vrot.slane %v509, 1
        %v512 = vsel %vm319, %v501, %v503
        %v514 = vrot.slane %v512, 2
        %v515 = vsel %vm322, %v501, %v503
        %v517 = vrot.slane %v515, 3
        %v518 = vunpack.i.l.s16 %v507
        %v519 = vunpack.i.h.s16 %v507
        %v520 = vunpack.i.l.s16 %v511
        %v521 = vunpack.i.h.s16 %v511
        %v522 = vunpack.i.l.s16 %v514
        %v523 = vunpack.i.h.s16 %v514
        %v524 = vunpack.i.l.s16 %v517
        %v525 = vunpack.i.h.s16 %v517
        %v526 = vpack.i.b16 %v518, %v518
        %v527 = vpack.i.b16 %v519, %v519
        %v528 = vpack.i.b16 %v520, %v520
        %v529 = vpack.i.b16 %v521, %v521
        %v530 = vpack.i.b16 %v522, %v522
        %v531 = vpack.i.b16 %v523, %v523
        %v532 = vpack.i.b16 %v524, %v524
        %v533 = vpack.i.b16 %v525, %v525
        %v535 = vunpack.c.l.s4 857870592
        %v536 = vunpack.c.0.s8 %v535
        %v537 = vperm.slane %v526, %v536
        %v539 = vunpack.c.l.s4 857870592
        %v540 = vunpack.c.0.s8 %v539
        %v541 = vperm.slane %v527, %v540
        %v543 = vunpack.c.l.s4 857870592
        %v544 = vunpack.c.0.s8 %v543
        %v545 = vperm.slane %v528, %v544
        %v547 = vunpack.c.l.s4 857870592
        %v548 = vunpack.c.0.s8 %v547
        %v549 = vperm.slane %v529, %v548
        %v551 = vunpack.c.l.s4 857870592
        %v552 = vunpack.c.0.s8 %v551
        %v553 = vperm.slane %v530, %v552
        %v555 = vunpack.c.l.s4 857870592
        %v556 = vunpack.c.0.s8 %v555
        %v557 = vperm.slane %v531, %v556
        %v559 = vunpack.c.l.s4 857870592
        %v560 = vunpack.c.0.s8 %v559
        %v561 = vperm.slane %v532, %v560
        %v563 = vunpack.c.l.s4 857870592
        %v564 = vunpack.c.0.s8 %v563
        %v565 = vperm.slane %v533, %v564
        %vm574 = vcmask 57344
        %vm575 = vsmask.f32 256
        %vm576 = vmand %vm574, %vm575
        %v577 = vld [vmem:[%s246] sm:$0x1]
        %v578 = vsel %vm576, %v537, %v577
        %579 = vst [vmem:[%s246] sm:$0x1] %v578
        %v580 = vld [vmem:[%s246 + $0x2] sm:$0x1]
        %v581 = vsel %vm576, %v541, %v580
        %582 = vst [vmem:[%s246 + $0x2] sm:$0x1] %v581
        %v583 = vld [vmem:[%s246 + $0x4] sm:$0x1]
        %v584 = vsel %vm576, %v545, %v583
        %585 = vst [vmem:[%s246 + $0x4] sm:$0x1] %v584
        %v586 = vld [vmem:[%s246 + $0x6] sm:$0x1]
        %v587 = vsel %vm576, %v549, %v586
        %588 = vst [vmem:[%s246 + $0x6] sm:$0x1] %v587
        %v589 = vld [vmem:[%s246 + $0x8] sm:$0x1]
        %v590 = vsel %vm576, %v553, %v589
        %591 = vst [vmem:[%s246 + $0x8] sm:$0x1] %v590
        %v592 = vld [vmem:[%s246 + $0xa] sm:$0x1]
        %v593 = vsel %vm576, %v557, %v592
        %594 = vst [vmem:[%s246 + $0xa] sm:$0x1] %v593
        %v595 = vld [vmem:[%s246 + $0xc] sm:$0x1]
        %v596 = vsel %vm576, %v561, %v595
        %597 = vst [vmem:[%s246 + $0xc] sm:$0x1] %v596
        %v598 = vld [vmem:[%s246 + $0xe] sm:$0x1]
        %v599 = vsel %vm576, %v565, %v598
        %600 = vst [vmem:[%s246 + $0xe] sm:$0x1] %v599
        %v601 = vld [vmem:[%s231] sm:$0x1]
        %v602 = vld [vmem:[%s231 + $0x6] sm:$0x1]
        %v603 = vld [vmem:[%s231 + $0xc] sm:$0x1]
        %v604 = vld [vmem:[%s231 + $0x12] sm:$0x1]
        %v605 = vld [vmem:[%s231 + $0x18] sm:$0x1]
        %v606 = vld [vmem:[%s231 + $0x1e] sm:$0x1]
        %v607 = vld [vmem:[%s231 + $0x24] sm:$0x1]
        %v608 = vld [vmem:[%s231 + $0x2a] sm:$0x1]
        %v609 = vld [vmem:[%s256] sm:$0x1]
        %v610 = vld [vmem:[%s256 + $0x6] sm:$0x1]
        %v611 = vld [vmem:[%s256 + $0xc] sm:$0x1]
        %v612 = vld [vmem:[%s256 + $0x12] sm:$0x1]
        %v613 = vld [vmem:[%s256 + $0x18] sm:$0x1]
        %v614 = vld [vmem:[%s256 + $0x1e] sm:$0x1]
        %v615 = vld [vmem:[%s256 + $0x24] sm:$0x1]
        %v616 = vld [vmem:[%s256 + $0x2a] sm:$0x1]
        %v617 = vld [vmem:[%s265] sm:$0x1]
        %v618 = vld [vmem:[%s265 + $0x6] sm:$0x1]
        %v619 = vld [vmem:[%s265 + $0xc] sm:$0x1]
        %v620 = vld [vmem:[%s265 + $0x12] sm:$0x1]
        %v621 = vld [vmem:[%s265 + $0x18] sm:$0x1]
        %v622 = vld [vmem:[%s265 + $0x1e] sm:$0x1]
        %v623 = vld [vmem:[%s265 + $0x24] sm:$0x1]
        %v624 = vld [vmem:[%s265 + $0x2a] sm:$0x1]
        %626 = vst [vmem:[#allocation1] ss:$4 sm:$0xff] %v601
        %v627 = vld.sshfl [vmem:[#allocation1] sm:$0xff pattern:$0x73625140]
        %s630 = scalar_lea.vmem [#allocation1], 32
        %631 = vst [vmem:[%s630] ss:$4 sm:$0xff] %v602
        %v632 = vld.sshfl [vmem:[#allocation1 + $0x20] sm:$0xff pattern:$0x73625140]
        %635 = vst [vmem:[#allocation1] ss:$4 sm:$0xff] %v603
        %v636 = vld.sshfl [vmem:[#allocation1] sm:$0xff pattern:$0x73625140]
        %639 = vst [vmem:[%s630] ss:$4 sm:$0xff] %v604
        %v640 = vld.sshfl [vmem:[#allocation1 + $0x20] sm:$0xff pattern:$0x73625140]
        %643 = vst [vmem:[#allocation1] ss:$4 sm:$0xff] %v605
        %v644 = vld.sshfl [vmem:[#allocation1] sm:$0xff pattern:$0x73625140]
        %647 = vst [vmem:[%s630] ss:$4 sm:$0xff] %v606
        %v648 = vld.sshfl [vmem:[#allocation1 + $0x20] sm:$0xff pattern:$0x73625140]
        %651 = vst [vmem:[#allocation1] ss:$4 sm:$0xff] %v607
        %v652 = vld.sshfl [vmem:[#allocation1] sm:$0xff pattern:$0x73625140]
        %655 = vst [vmem:[%s630] ss:$4 sm:$0xff] %v608
        %v656 = vld.sshfl [vmem:[#allocation1 + $0x20] sm:$0xff pattern:$0x73625140]
        %v658 = vunpack.c.l.b16 %v627
        %v659 = vunpack.c.l.b16 %v632
        %v660 = vunpack.c.l.b16 %v636
        %v661 = vunpack.c.l.b16 %v640
        %v662 = vunpack.c.l.b16 %v644
        %v663 = vunpack.c.l.b16 %v648
        %v664 = vunpack.c.l.b16 %v652
        %v665 = vunpack.c.l.b16 %v656
        %v666 = vrot.slane %v658, 1
        %v667 = vsel %vm316, %v659, %v666
        %v668 = vrot.slane %v660, 7
        %v669 = vsel %vm319, %v668, %v667
        %v670 = vrot.slane %v661, 6
        %v671 = vsel %vm322, %v670, %v669
        %v672 = vrot.slane %v662, 5
        %v673 = vsel %vm325, %v672, %v671
        %v674 = vrot.slane %v663, 4
        %v675 = vsel %vm328, %v674, %v673
        %v676 = vrot.slane %v664, 3
        %v677 = vsel %vm331, %v676, %v675
        %v678 = vrot.slane %v665, 2
        %v679 = vsel %vm334, %v678, %v677
        %v680 = vpack.c.b16 %v679, %v679
        %682 = vst [vmem:[#allocation1] ss:$4 sm:$0xff] %v609
        %v683 = vld.sshfl [vmem:[#allocation1] sm:$0xff pattern:$0x73625140]
        %s686 = scalar_lea.vmem [#allocation1], 32
        %687 = vst [vmem:[%s686] ss:$4 sm:$0xff] %v610
        %v688 = vld.sshfl [vmem:[#allocation1 + $0x20] sm:$0xff pattern:$0x73625140]
        %691 = vst [vmem:[#allocation1] ss:$4 sm:$0xff] %v611
        %v692 = vld.sshfl [vmem:[#allocation1] sm:$0xff pattern:$0x73625140]
        %695 = vst [vmem:[%s686] ss:$4 sm:$0xff] %v612
        %v696 = vld.sshfl [vmem:[#allocation1 + $0x20] sm:$0xff pattern:$0x73625140]
        %699 = vst [vmem:[#allocation1] ss:$4 sm:$0xff] %v613
        %v700 = vld.sshfl [vmem:[#allocation1] sm:$0xff pattern:$0x73625140]
        %703 = vst [vmem:[%s686] ss:$4 sm:$0xff] %v614
        %v704 = vld.sshfl [vmem:[#allocation1 + $0x20] sm:$0xff pattern:$0x73625140]
        %707 = vst [vmem:[#allocation1] ss:$4 sm:$0xff] %v615
        %v708 = vld.sshfl [vmem:[#allocation1] sm:$0xff pattern:$0x73625140]
        %711 = vst [vmem:[%s686] ss:$4 sm:$0xff] %v616
        %v712 = vld.sshfl [vmem:[#allocation1 + $0x20] sm:$0xff pattern:$0x73625140]
        %v714 = vunpack.c.l.b16 %v683
        %v715 = vunpack.c.l.b16 %v688
        %v716 = vunpack.c.l.b16 %v692
        %v717 = vunpack.c.l.b16 %v696
        %v718 = vunpack.c.l.b16 %v700
        %v719 = vunpack.c.l.b16 %v704
        %v720 = vunpack.c.l.b16 %v708
        %v721 = vunpack.c.l.b16 %v712
        %v722 = vrot.slane %v714, 1
        %v723 = vsel %vm316, %v715, %v722
        %v724 = vrot.slane %v716, 7
        %v725 = vsel %vm319, %v724, %v723
        %v726 = vrot.slane %v717, 6
        %v727 = vsel %vm322, %v726, %v725
        %v728 = vrot.slane %v718, 5
        %v729 = vsel %vm325, %v728, %v727
        %v730 = vrot.slane %v719, 4
        %v731 = vsel %vm328, %v730, %v729
        %v732 = vrot.slane %v720, 3
        %v733 = vsel %vm331, %v732, %v731
        %v734 = vrot.slane %v721, 2
        %v735 = vsel %vm334, %v734, %v733
        %v736 = vpack.c.b16 %v735, %v735
        %v738 = vsel %vm393, %v680, 0
        %v741 = vsel %vm393, %v736, 0
        %743 = vmatpush.bf16.xpose.msra.mxu0 0
        %744 = vmatpush.bf16.xpose.msra.mxu0 0
        %745 = vmatpush.bf16.xpose.msra.mxu0 0
        %746 = vmatpush.bf16.xpose.msra.mxu0 0
        %747 = vmatpush.bf16.xpose.msra.mxu0 0
        %748 = vmatpush.bf16.xpose.msra.mxu0 0
        %749 = vmatpush.bf16.xpose.msra.mxu0 0
        %750 = vmatpush.bf16.xpose.msra.mxu0 %v741
        %751 = vmatmul.bf16.gmra.mxu0 %v738
        %v752 = vpop.f32.mrf.mxu0
        %v753 = vadd.f32 0.0, %v752
        %v754 = vpop.f32.mrf.mxu0
        %755 = vdwg.mxu0
        %v756 = vsel %vm393, %v753, -inf
        %757 = vmax.xlane.f32.xlu0 %v756
        %v758 = vpop.xlane.xlu0 %757
        %v759 = vsub.f32 %v753, %v758
        %v760 = vmul.f32 %v759, 1.442695
        %v761 = vpow.pop %v760
        %v762 = vsel %vm393, %v761, 0.0
        %763 = vadd.xlane.f32.xlu0 %v762
        %v764 = vpop.xlane.xlu0 %763
        %v765 = vpack.c.bf16 %v761, %v761
        %767 = vst [vmem:[#allocation1] ss:$4 sm:$0xff] %v617
        %v768 = vld.sshfl [vmem:[#allocation1] sm:$0xff pattern:$0x73625140]
        %s771 = scalar_lea.vmem [#allocation1], 32
        %772 = vst [vmem:[%s771] ss:$4 sm:$0xff] %v618
        %v773 = vld.sshfl [vmem:[#allocation1 + $0x20] sm:$0xff pattern:$0x73625140]
        %776 = vst [vmem:[#allocation1] ss:$4 sm:$0xff] %v619
        %v777 = vld.sshfl [vmem:[#allocation1] sm:$0xff pattern:$0x73625140]
        %780 = vst [vmem:[%s771] ss:$4 sm:$0xff] %v620
        %v781 = vld.sshfl [vmem:[#allocation1 + $0x20] sm:$0xff pattern:$0x73625140]
        %784 = vst [vmem:[#allocation1] ss:$4 sm:$0xff] %v621
        %v785 = vld.sshfl [vmem:[#allocation1] sm:$0xff pattern:$0x73625140]
        %788 = vst [vmem:[%s771] ss:$4 sm:$0xff] %v622
        %v789 = vld.sshfl [vmem:[#allocation1 + $0x20] sm:$0xff pattern:$0x73625140]
        %792 = vst [vmem:[#allocation1] ss:$4 sm:$0xff] %v623
        %v793 = vld.sshfl [vmem:[#allocation1] sm:$0xff pattern:$0x73625140]
        %796 = vst [vmem:[%s771] ss:$4 sm:$0xff] %v624
        %v797 = vld.sshfl [vmem:[#allocation1 + $0x20] sm:$0xff pattern:$0x73625140]
        %v799 = vunpack.c.l.b16 %v768
        %v800 = vunpack.c.l.b16 %v773
        %v801 = vunpack.c.l.b16 %v777
        %v802 = vunpack.c.l.b16 %v781
        %v803 = vunpack.c.l.b16 %v785
        %v804 = vunpack.c.l.b16 %v789
        %v805 = vunpack.c.l.b16 %v793
        %v806 = vunpack.c.l.b16 %v797
        %v807 = vrot.slane %v799, 1
        %v808 = vsel %vm316, %v800, %v807
        %v809 = vrot.slane %v801, 7
        %v810 = vsel %vm319, %v809, %v808
        %v811 = vrot.slane %v802, 6
        %v812 = vsel %vm322, %v811, %v810
        %v813 = vrot.slane %v803, 5
        %v814 = vsel %vm325, %v813, %v812
        %v815 = vrot.slane %v804, 4
        %v816 = vsel %vm328, %v815, %v814
        %v817 = vrot.slane %v805, 3
        %v818 = vsel %vm331, %v817, %v816
        %v819 = vrot.slane %v806, 2
        %v820 = vsel %vm334, %v819, %v818
        %v821 = vpack.c.b16 %v820, %v820
        %v823 = vsel %vm393, %v765, 0
        %v826 = vsel %vm482, %v821, 0
        %828 = vmatpush.bf16.msra.mxu0 0
        %829 = vmatpush.bf16.msra.mxu0 0
        %830 = vmatpush.bf16.msra.mxu0 0
        %831 = vmatpush.bf16.msra.mxu0 0
        %832 = vmatpush.bf16.msra.mxu0 0
        %833 = vmatpush.bf16.msra.mxu0 0
        %834 = vmatpush.bf16.msra.mxu0 0
        %835 = vmatpush.bf16.msra.mxu0 %v826
        %836 = vmatmul.bf16.gmra.mxu0 %v823
        %v837 = vpop.f32.mrf.mxu0
        %v838 = vadd.f32 0.0, %v837
        %v839 = vpop.f32.mrf.mxu0
        %840 = vdwg.mxu0
        %v841 = vrcp.pop %v764
        %v842 = vmul.f32 %v838, %v841
        %v843 = vpack.c.bf16 %v842, %v842
        %v845 = vrot.slane %v843, 3
        %v848 = vsel %vm504, %v843, %v845
        %v850 = vsel %vm316, %v843, %v845
        %v852 = vrot.slane %v850, 1
        %v853 = vsel %vm319, %v843, %v845
        %v855 = vrot.slane %v853, 2
        %v856 = vsel %vm322, %v843, %v845
        %v858 = vrot.slane %v856, 3
        %v859 = vunpack.i.l.s16 %v848
        %v860 = vunpack.i.h.s16 %v848
        %v861 = vunpack.i.l.s16 %v852
        %v862 = vunpack.i.h.s16 %v852
        %v863 = vunpack.i.l.s16 %v855
        %v864 = vunpack.i.h.s16 %v855
        %v865 = vunpack.i.l.s16 %v858
        %v866 = vunpack.i.h.s16 %v858
        %v867 = vpack.i.b16 %v859, %v859
        %v868 = vpack.i.b16 %v860, %v860
        %v869 = vpack.i.b16 %v861, %v861
        %v870 = vpack.i.b16 %v862, %v862
        %v871 = vpack.i.b16 %v863, %v863
        %v872 = vpack.i.b16 %v864, %v864
        %v873 = vpack.i.b16 %v865, %v865
        %v874 = vpack.i.b16 %v866, %v866
        %v876 = vunpack.c.l.s4 857870592
        %v877 = vunpack.c.0.s8 %v876
        %v878 = vperm.slane %v867, %v877
        %v880 = vunpack.c.l.s4 857870592
        %v881 = vunpack.c.0.s8 %v880
        %v882 = vperm.slane %v868, %v881
        %v884 = vunpack.c.l.s4 857870592
        %v885 = vunpack.c.0.s8 %v884
        %v886 = vperm.slane %v869, %v885
        %v888 = vunpack.c.l.s4 857870592
        %v889 = vunpack.c.0.s8 %v888
        %v890 = vperm.slane %v870, %v889
        %v892 = vunpack.c.l.s4 857870592
        %v893 = vunpack.c.0.s8 %v892
        %v894 = vperm.slane %v871, %v893
        %v896 = vunpack.c.l.s4 857870592
        %v897 = vunpack.c.0.s8 %v896
        %v898 = vperm.slane %v872, %v897
        %v900 = vunpack.c.l.s4 857870592
        %v901 = vunpack.c.0.s8 %v900
        %v902 = vperm.slane %v873, %v901
        %v904 = vunpack.c.l.s4 857870592
        %v905 = vunpack.c.0.s8 %v904
        %v906 = vperm.slane %v874, %v905
        %vm915 = vsmask.f32 7938
        %vm916 = vmand %vm574, %vm915
        %v917 = vld [vmem:[%s246] sm:$0x1]
        %v918 = vsel %vm916, %v878, %v917
        %919 = vst [vmem:[%s246] sm:$0x1] %v918
        %v920 = vld [vmem:[%s246 + $0x2] sm:$0x1]
        %v921 = vsel %vm916, %v882, %v920
        %922 = vst [vmem:[%s246 + $0x2] sm:$0x1] %v921
        %v923 = vld [vmem:[%s246 + $0x4] sm:$0x1]
        %v924 = vsel %vm916, %v886, %v923
        %925 = vst [vmem:[%s246 + $0x4] sm:$0x1] %v924
        %v926 = vld [vmem:[%s246 + $0x6] sm:$0x1]
        %v927 = vsel %vm916, %v890, %v926
        %928 = vst [vmem:[%s246 + $0x6] sm:$0x1] %v927
        %v929 = vld [vmem:[%s246 + $0x8] sm:$0x1]
        %v930 = vsel %vm916, %v894, %v929
        %931 = vst [vmem:[%s246 + $0x8] sm:$0x1] %v930
        %v932 = vld [vmem:[%s246 + $0xa] sm:$0x1]
        %v933 = vsel %vm916, %v898, %v932
        %934 = vst [vmem:[%s246 + $0xa] sm:$0x1] %v933
        %v935 = vld [vmem:[%s246 + $0xc] sm:$0x1]
        %v936 = vsel %vm916, %v902, %v935
        %937 = vst [vmem:[%s246 + $0xc] sm:$0x1] %v936
        %v938 = vld [vmem:[%s246 + $0xe] sm:$0x1]
        %v939 = vsel %vm916, %v906, %v938
        %940 = vst [vmem:[%s246 + $0xe] sm:$0x1] %v939
        %v941 = vld [vmem:[%s231] sm:$0x2]
        %v942 = vld [vmem:[%s231 + $0x6] sm:$0x2]
        %v943 = vld [vmem:[%s231 + $0xc] sm:$0x2]
        %v944 = vld [vmem:[%s231 + $0x12] sm:$0x2]
        %v945 = vld [vmem:[%s231 + $0x18] sm:$0x2]
        %v946 = vld [vmem:[%s231 + $0x1e] sm:$0x2]
        %v947 = vld [vmem:[%s231 + $0x24] sm:$0x2]
        %v948 = vld [vmem:[%s231 + $0x2a] sm:$0x2]
        %v949 = vld [vmem:[%s256] sm:$0x2]
        %v950 = vld [vmem:[%s256 + $0x6] sm:$0x2]
        %v951 = vld [vmem:[%s256 + $0xc] sm:$0x2]
        %v952 = vld [vmem:[%s256 + $0x12] sm:$0x2]
        %v953 = vld [vmem:[%s256 + $0x18] sm:$0x2]
        %v954 = vld [vmem:[%s256 + $0x1e] sm:$0x2]
        %v955 = vld [vmem:[%s256 + $0x24] sm:$0x2]
        %v956 = vld [vmem:[%s256 + $0x2a] sm:$0x2]
        %v957 = vld [vmem:[%s265] sm:$0x2]
        %v958 = vld [vmem:[%s265 + $0x6] sm:$0x2]
        %v959 = vld [vmem:[%s265 + $0xc] sm:$0x2]
        %v960 = vld [vmem:[%s265 + $0x12] sm:$0x2]
        %v961 = vld [vmem:[%s265 + $0x18] sm:$0x2]
        %v962 = vld [vmem:[%s265 + $0x1e] sm:$0x2]
        %v963 = vld [vmem:[%s265 + $0x24] sm:$0x2]
        %v964 = vld [vmem:[%s265 + $0x2a] sm:$0x2]
        %966 = vst [vmem:[#allocation1] ss:$4 sm:$0xff] %v941
        %v967 = vld.sshfl [vmem:[#allocation1] sm:$0xff pattern:$0x73625140]
        %s970 = scalar_lea.vmem [#allocation1], 32
        %971 = vst [vmem:[%s970] ss:$4 sm:$0xff] %v942
        %v972 = vld.sshfl [vmem:[#allocation1 + $0x20] sm:$0xff pattern:$0x73625140]
        %975 = vst [vmem:[#allocation1] ss:$4 sm:$0xff] %v943
        %v976 = vld.sshfl [vmem:[#allocation1] sm:$0xff pattern:$0x73625140]
        %979 = vst [vmem:[%s970] ss:$4 sm:$0xff] %v944
        %v980 = vld.sshfl [vmem:[#allocation1 + $0x20] sm:$0xff pattern:$0x73625140]
        %983 = vst [vmem:[#allocation1] ss:$4 sm:$0xff] %v945
        %v984 = vld.sshfl [vmem:[#allocation1] sm:$0xff pattern:$0x73625140]
        %987 = vst [vmem:[%s970] ss:$4 sm:$0xff] %v946
        %v988 = vld.sshfl [vmem:[#allocation1 + $0x20] sm:$0xff pattern:$0x73625140]
        %991 = vst [vmem:[#allocation1] ss:$4 sm:$0xff] %v947
        %v992 = vld.sshfl [vmem:[#allocation1] sm:$0xff pattern:$0x73625140]
        %995 = vst [vmem:[%s970] ss:$4 sm:$0xff] %v948
        %v996 = vld.sshfl [vmem:[#allocation1 + $0x20] sm:$0xff pattern:$0x73625140]
        %v998 = vunpack.c.l.b16 %v967
        %v999 = vunpack.c.l.b16 %v972
        %v1000 = vunpack.c.l.b16 %v976
        %v1001 = vunpack.c.l.b16 %v980
        %v1002 = vunpack.c.l.b16 %v984
        %v1003 = vunpack.c.l.b16 %v988
        %v1004 = vunpack.c.l.b16 %v992
        %v1005 = vunpack.c.l.b16 %v996
        %v1006 = vrot.slane %v998, 2
        %v1007 = vrot.slane %v999, 1
        %v1008 = vsel %vm316, %v1007, %v1006
        %v1009 = vsel %vm319, %v1000, %v1008
        %v1010 = vrot.slane %v1001, 7
        %v1011 = vsel %vm322, %v1010, %v1009
        %v1012 = vrot.slane %v1002, 6
        %v1013 = vsel %vm325, %v1012, %v1011
        %v1014 = vrot.slane %v1003, 5
        %v1015 = vsel %vm328, %v1014, %v1013
        %v1016 = vrot.slane %v1004, 4
        %v1017 = vsel %vm331, %v1016, %v1015
        %v1018 = vrot.slane %v1005, 3
        %v1019 = vsel %vm334, %v1018, %v1017
        %v1020 = vpack.c.b16 %v1019, %v1019
        %1022 = vst [vmem:[#allocation1] ss:$4 sm:$0xff] %v949
        %v1023 = vld.sshfl [vmem:[#allocation1] sm:$0xff pattern:$0x73625140]
        %s1026 = scalar_lea.vmem [#allocation1], 32
        %1027 = vst [vmem:[%s1026] ss:$4 sm:$0xff] %v950
        %v1028 = vld.sshfl [vmem:[#allocation1 + $0x20] sm:$0xff pattern:$0x73625140]
        %1031 = vst [vmem:[#allocation1] ss:$4 sm:$0xff] %v951
        %v1032 = vld.sshfl [vmem:[#allocation1] sm:$0xff pattern:$0x73625140]
        %1035 = vst [vmem:[%s1026] ss:$4 sm:$0xff] %v952
        %v1036 = vld.sshfl [vmem:[#allocation1 + $0x20] sm:$0xff pattern:$0x73625140]
        %1039 = vst [vmem:[#allocation1] ss:$4 sm:$0xff] %v953
        %v1040 = vld.sshfl [vmem:[#allocation1] sm:$0xff pattern:$0x73625140]
        %1043 = vst [vmem:[%s1026] ss:$4 sm:$0xff] %v954
        %v1044 = vld.sshfl [vmem:[#allocation1 + $0x20] sm:$0xff pattern:$0x73625140]
        %1047 = vst [vmem:[#allocation1] ss:$4 sm:$0xff] %v955
        %v1048 = vld.sshfl [vmem:[#allocation1] sm:$0xff pattern:$0x73625140]
        %1051 = vst [vmem:[%s1026] ss:$4 sm:$0xff] %v956
        %v1052 = vld.sshfl [vmem:[#allocation1 + $0x20] sm:$0xff pattern:$0x73625140]
        %v1054 = vunpack.c.l.b16 %v1023
        %v1055 = vunpack.c.l.b16 %v1028
        %v1056 = vunpack.c.l.b16 %v1032
        %v1057 = vunpack.c.l.b16 %v1036
        %v1058 = vunpack.c.l.b16 %v1040
        %v1059 = vunpack.c.l.b16 %v1044
        %v1060 = vunpack.c.l.b16 %v1048
        %v1061 = vunpack.c.l.b16 %v1052
        %v1062 = vrot.slane %v1054, 2
        %v1063 = vrot.slane %v1055, 1
        %v1064 = vsel %vm316, %v1063, %v1062
        %v1065 = vsel %vm319, %v1056, %v1064
        %v1066 = vrot.slane %v1057, 7
        %v1067 = vsel %vm322, %v1066, %v1065
        %v1068 = vrot.slane %v1058, 6
        %v1069 = vsel %vm325, %v1068, %v1067
        %v1070 = vrot.slane %v1059, 5
        %v1071 = vsel %vm328, %v1070, %v1069
        %v1072 = vrot.slane %v1060, 4
        %v1073 = vsel %vm331, %v1072, %v1071
        %v1074 = vrot.slane %v1061, 3
        %v1075 = vsel %vm334, %v1074, %v1073
        %v1076 = vpack.c.b16 %v1075, %v1075
        %v1078 = vsel %vm393, %v1020, 0
        %v1081 = vsel %vm393, %v1076, 0
        %1083 = vmatpush.bf16.xpose.msra.mxu0 0
        %1084 = vmatpush.bf16.xpose.msra.mxu0 0
        %1085 = vmatpush.bf16.xpose.msra.mxu0 0
        %1086 = vmatpush.bf16.xpose.msra.mxu0 0
        %1087 = vmatpush.bf16.xpose.msra.mxu0 0
        %1088 = vmatpush.bf16.xpose.msra.mxu0 0
        %1089 = vmatpush.bf16.xpose.msra.mxu0 0
        %1090 = vmatpush.bf16.xpose.msra.mxu0 %v1081
        %1091 = vmatmul.bf16.gmra.mxu0 %v1078
        %v1092 = vpop.f32.mrf.mxu0
        %v1093 = vadd.f32 0.0, %v1092
        %v1094 = vpop.f32.mrf.mxu0
        %1095 = vdwg.mxu0
        %v1096 = vsel %vm393, %v1093, -inf
        %1097 = vmax.xlane.f32.xlu0 %v1096
        %v1098 = vpop.xlane.xlu0 %1097
        %v1099 = vsub.f32 %v1093, %v1098
        %v1100 = vmul.f32 %v1099, 1.442695
        %v1101 = vpow.pop %v1100
        %v1102 = vsel %vm393, %v1101, 0.0
        %1103 = vadd.xlane.f32.xlu0 %v1102
        %v1104 = vpop.xlane.xlu0 %1103
        %v1105 = vpack.c.bf16 %v1101, %v1101
        %1107 = vst [vmem:[#allocation1] ss:$4 sm:$0xff] %v957
        %v1108 = vld.sshfl [vmem:[#allocation1] sm:$0xff pattern:$0x73625140]
        %s1111 = scalar_lea.vmem [#allocation1], 32
        %1112 = vst [vmem:[%s1111] ss:$4 sm:$0xff] %v958
        %v1113 = vld.sshfl [vmem:[#allocation1 + $0x20] sm:$0xff pattern:$0x73625140]
        %1116 = vst [vmem:[#allocation1] ss:$4 sm:$0xff] %v959
        %v1117 = vld.sshfl [vmem:[#allocation1] sm:$0xff pattern:$0x73625140]
        %1120 = vst [vmem:[%s1111] ss:$4 sm:$0xff] %v960
        %v1121 = vld.sshfl [vmem:[#allocation1 + $0x20] sm:$0xff pattern:$0x73625140]
        %1124 = vst [vmem:[#allocation1] ss:$4 sm:$0xff] %v961
        %v1125 = vld.sshfl [vmem:[#allocation1] sm:$0xff pattern:$0x73625140]
        %1128 = vst [vmem:[%s1111] ss:$4 sm:$0xff] %v962
        %v1129 = vld.sshfl [vmem:[#allocation1 + $0x20] sm:$0xff pattern:$0x73625140]
        %1132 = vst [vmem:[#allocation1] ss:$4 sm:$0xff] %v963
        %v1133 = vld.sshfl [vmem:[#allocation1] sm:$0xff pattern:$0x73625140]
        %1136 = vst [vmem:[%s1111] ss:$4 sm:$0xff] %v964
        %v1137 = vld.sshfl [vmem:[#allocation1 + $0x20] sm:$0xff pattern:$0x73625140]
        %v1139 = vunpack.c.l.b16 %v1108
        %v1140 = vunpack.c.l.b16 %v1113
        %v1141 = vunpack.c.l.b16 %v1117
        %v1142 = vunpack.c.l.b16 %v1121
        %v1143 = vunpack.c.l.b16 %v1125
        %v1144 = vunpack.c.l.b16 %v1129
        %v1145 = vunpack.c.l.b16 %v1133
        %v1146 = vunpack.c.l.b16 %v1137
        %v1147 = vrot.slane %v1139, 2
        %v1148 = vrot.slane %v1140, 1
        %v1149 = vsel %vm316, %v1148, %v1147
        %v1150 = vsel %vm319, %v1141, %v1149
        %v1151 = vrot.slane %v1142, 7
        %v1152 = vsel %vm322, %v1151, %v1150
        %v1153 = vrot.slane %v1143, 6
        %v1154 = vsel %vm325, %v1153, %v1152
        %v1155 = vrot.slane %v1144, 5
        %v1156 = vsel %vm328, %v1155, %v1154
        %v1157 = vrot.slane %v1145, 4
        %v1158 = vsel %vm331, %v1157, %v1156
        %v1159 = vrot.slane %v1146, 3
        %v1160 = vsel %vm334, %v1159, %v1158
        %v1161 = vpack.c.b16 %v1160, %v1160
        %v1163 = vsel %vm393, %v1105, 0
        %v1166 = vsel %vm482, %v1161, 0
        %1168 = vmatpush.bf16.msra.mxu0 0
        %1169 = vmatpush.bf16.msra.mxu0 0
        %1170 = vmatpush.bf16.msra.mxu0 0
        %1171 = vmatpush.bf16.msra.mxu0 0
        %1172 = vmatpush.bf16.msra.mxu0 0
        %1173 = vmatpush.bf16.msra.mxu0 0
        %1174 = vmatpush.bf16.msra.mxu0 0
        %1175 = vmatpush.bf16.msra.mxu0 %v1166
        %1176 = vmatmul.bf16.gmra.mxu0 %v1163
        %v1177 = vpop.f32.mrf.mxu0
        %v1178 = vadd.f32 0.0, %v1177
        %v1179 = vpop.f32.mrf.mxu0
        %1180 = vdwg.mxu0
        %v1181 = vrcp.pop %v1104
        %v1182 = vmul.f32 %v1178, %v1181
        %v1183 = vpack.c.bf16 %v1182, %v1182
        %v1185 = vrot.slane %v1183, 3
        %v1188 = vsel %vm504, %v1183, %v1185
        %v1190 = vsel %vm316, %v1183, %v1185
        %v1192 = vrot.slane %v1190, 1
        %v1193 = vsel %vm319, %v1183, %v1185
        %v1195 = vrot.slane %v1193, 2
        %v1196 = vsel %vm322, %v1183, %v1185
        %v1198 = vrot.slane %v1196, 3
        %v1199 = vunpack.i.l.s16 %v1188
        %v1200 = vunpack.i.h.s16 %v1188
        %v1201 = vunpack.i.l.s16 %v1192
        %v1202 = vunpack.i.h.s16 %v1192
        %v1203 = vunpack.i.l.s16 %v1195
        %v1204 = vunpack.i.h.s16 %v1195
        %v1205 = vunpack.i.l.s16 %v1198
        %v1206 = vunpack.i.h.s16 %v1198
        %v1207 = vpack.i.b16 %v1199, %v1199
        %v1208 = vpack.i.b16 %v1200, %v1200
        %v1209 = vpack.i.b16 %v1201, %v1201
        %v1210 = vpack.i.b16 %v1202, %v1202
        %v1211 = vpack.i.b16 %v1203, %v1203
        %v1212 = vpack.i.b16 %v1204, %v1204
        %v1213 = vpack.i.b16 %v1205, %v1205
        %v1214 = vpack.i.b16 %v1206, %v1206
        %v1216 = vunpack.c.l.s4 857870592
        %v1217 = vunpack.c.0.s8 %v1216
        %v1218 = vperm.slane %v1207, %v1217
        %v1220 = vunpack.c.l.s4 857870592
        %v1221 = vunpack.c.0.s8 %v1220
        %v1222 = vperm.slane %v1208, %v1221
        %v1224 = vunpack.c.l.s4 857870592
        %v1225 = vunpack.c.0.s8 %v1224
        %v1226 = vperm.slane %v1209, %v1225
        %v1228 = vunpack.c.l.s4 857870592
        %v1229 = vunpack.c.0.s8 %v1228
        %v1230 = vperm.slane %v1210, %v1229
        %v1232 = vunpack.c.l.s4 857870592
        %v1233 = vunpack.c.0.s8 %v1232
        %v1234 = vperm.slane %v1211, %v1233
        %v1236 = vunpack.c.l.s4 857870592
        %v1237 = vunpack.c.0.s8 %v1236
        %v1238 = vperm.slane %v1212, %v1237
        %v1240 = vunpack.c.l.s4 857870592
        %v1241 = vunpack.c.0.s8 %v1240
        %v1242 = vperm.slane %v1213, %v1241
        %v1244 = vunpack.c.l.s4 857870592
        %v1245 = vunpack.c.0.s8 %v1244
        %v1246 = vperm.slane %v1214, %v1245
        %vm1255 = vcmask 58369
        %vm1256 = vsmask.f32 1280
        %vm1257 = vmand %vm1255, %vm1256
        %v1258 = vld [vmem:[%s246] sm:$0x2]
        %v1259 = vsel %vm1257, %v1218, %v1258
        %1260 = vst [vmem:[%s246] sm:$0x2] %v1259
        %v1261 = vld [vmem:[%s246 + $0x2] sm:$0x2]
        %v1262 = vsel %vm1257, %v1222, %v1261
        %1263 = vst [vmem:[%s246 + $0x2] sm:$0x2] %v1262
        %v1264 = vld [vmem:[%s246 + $0x4] sm:$0x2]
        %v1265 = vsel %vm1257, %v1226, %v1264
        %1266 = vst [vmem:[%s246 + $0x4] sm:$0x2] %v1265
        %v1267 = vld [vmem:[%s246 + $0x6] sm:$0x2]
        %v1268 = vsel %vm1257, %v1230, %v1267
        %1269 = vst [vmem:[%s246 + $0x6] sm:$0x2] %v1268
        %v1270 = vld [vmem:[%s246 + $0x8] sm:$0x2]
        %v1271 = vsel %vm1257, %v1234, %v1270
        %1272 = vst [vmem:[%s246 + $0x8] sm:$0x2] %v1271
        %v1273 = vld [vmem:[%s246 + $0xa] sm:$0x2]
        %v1274 = vsel %vm1257, %v1238, %v1273
        %1275 = vst [vmem:[%s246 + $0xa] sm:$0x2] %v1274
        %v1276 = vld [vmem:[%s246 + $0xc] sm:$0x2]
        %v1277 = vsel %vm1257, %v1242, %v1276
        %1278 = vst [vmem:[%s246 + $0xc] sm:$0x2] %v1277
        %v1279 = vld [vmem:[%s246 + $0xe] sm:$0x2]
        %v1280 = vsel %vm1257, %v1246, %v1279
        %1281 = vst [vmem:[%s246 + $0xe] sm:$0x2] %v1280
        %v1282 = vld [vmem:[%s231] sm:$0x2]
        %v1283 = vld [vmem:[%s231 + $0x6] sm:$0x2]
        %v1284 = vld [vmem:[%s231 + $0xc] sm:$0x2]
        %v1285 = vld [vmem:[%s231 + $0x12] sm:$0x2]
        %v1286 = vld [vmem:[%s231 + $0x18] sm:$0x2]
        %v1287 = vld [vmem:[%s231 + $0x1e] sm:$0x2]
        %v1288 = vld [vmem:[%s231 + $0x24] sm:$0x2]
        %v1289 = vld [vmem:[%s231 + $0x2a] sm:$0x2]
        %v1290 = vld [vmem:[%s256] sm:$0x2]
        %v1291 = vld [vmem:[%s256 + $0x6] sm:$0x2]
        %v1292 = vld [vmem:[%s256 + $0xc] sm:$0x2]
        %v1293 = vld [vmem:[%s256 + $0x12] sm:$0x2]
        %v1294 = vld [vmem:[%s256 + $0x18] sm:$0x2]
        %v1295 = vld [vmem:[%s256 + $0x1e] sm:$0x2]
        %v1296 = vld [vmem:[%s256 + $0x24] sm:$0x2]
        %v1297 = vld [vmem:[%s256 + $0x2a] sm:$0x2]
        %v1298 = vld [vmem:[%s265] sm:$0x2]
        %v1299 = vld [vmem:[%s265 + $0x6] sm:$0x2]
        %v1300 = vld [vmem:[%s265 + $0xc] sm:$0x2]
        %v1301 = vld [vmem:[%s265 + $0x12] sm:$0x2]
        %v1302 = vld [vmem:[%s265 + $0x18] sm:$0x2]
        %v1303 = vld [vmem:[%s265 + $0x1e] sm:$0x2]
        %v1304 = vld [vmem:[%s265 + $0x24] sm:$0x2]
        %v1305 = vld [vmem:[%s265 + $0x2a] sm:$0x2]
        %1307 = vst [vmem:[#allocation1] ss:$4 sm:$0xff] %v1282
        %v1308 = vld.sshfl [vmem:[#allocation1] sm:$0xff pattern:$0x73625140]
        %s1311 = scalar_lea.vmem [#allocation1], 32
        %1312 = vst [vmem:[%s1311] ss:$4 sm:$0xff] %v1283
        %v1313 = vld.sshfl [vmem:[#allocation1 + $0x20] sm:$0xff pattern:$0x73625140]
        %1316 = vst [vmem:[#allocation1] ss:$4 sm:$0xff] %v1284
        %v1317 = vld.sshfl [vmem:[#allocation1] sm:$0xff pattern:$0x73625140]
        %1320 = vst [vmem:[%s1311] ss:$4 sm:$0xff] %v1285
        %v1321 = vld.sshfl [vmem:[#allocation1 + $0x20] sm:$0xff pattern:$0x73625140]
        %1324 = vst [vmem:[#allocation1] ss:$4 sm:$0xff] %v1286
        %v1325 = vld.sshfl [vmem:[#allocation1] sm:$0xff pattern:$0x73625140]
        %1328 = vst [vmem:[%s1311] ss:$4 sm:$0xff] %v1287
        %v1329 = vld.sshfl [vmem:[#allocation1 + $0x20] sm:$0xff pattern:$0x73625140]
        %1332 = vst [vmem:[#allocation1] ss:$4 sm:$0xff] %v1288
        %v1333 = vld.sshfl [vmem:[#allocation1] sm:$0xff pattern:$0x73625140]
        %1336 = vst [vmem:[%s1311] ss:$4 sm:$0xff] %v1289
        %v1337 = vld.sshfl [vmem:[#allocation1 + $0x20] sm:$0xff pattern:$0x73625140]
        %v1339 = vunpack.c.l.b16 %v1308
        %v1340 = vunpack.c.l.b16 %v1313
        %v1341 = vunpack.c.l.b16 %v1317
        %v1342 = vunpack.c.l.b16 %v1321
        %v1343 = vunpack.c.l.b16 %v1325
        %v1344 = vunpack.c.l.b16 %v1329
        %v1345 = vunpack.c.l.b16 %v1333
        %v1346 = vunpack.c.l.b16 %v1337
        %v1347 = vrot.slane %v1339, 3
        %v1348 = vrot.slane %v1340, 2
        %v1349 = vsel %vm316, %v1348, %v1347
        %v1350 = vrot.slane %v1341, 1
        %v1351 = vsel %vm319, %v1350, %v1349
        %v1352 = vsel %vm322, %v1342, %v1351
        %v1353 = vrot.slane %v1343, 7
        %v1354 = vsel %vm325, %v1353, %v1352
        %v1355 = vrot.slane %v1344, 6
        %v1356 = vsel %vm328, %v1355, %v1354
        %v1357 = vrot.slane %v1345, 5
        %v1358 = vsel %vm331, %v1357, %v1356
        %v1359 = vrot.slane %v1346, 4
        %v1360 = vsel %vm334, %v1359, %v1358
        %v1361 = vpack.c.b16 %v1360, %v1360
        %1363 = vst [vmem:[#allocation1] ss:$4 sm:$0xff] %v1290
        %v1364 = vld.sshfl [vmem:[#allocation1] sm:$0xff pattern:$0x73625140]
        %s1367 = scalar_lea.vmem [#allocation1], 32
        %1368 = vst [vmem:[%s1367] ss:$4 sm:$0xff] %v1291
        %v1369 = vld.sshfl [vmem:[#allocation1 + $0x20] sm:$0xff pattern:$0x73625140]
        %1372 = vst [vmem:[#allocation1] ss:$4 sm:$0xff] %v1292
        %v1373 = vld.sshfl [vmem:[#allocation1] sm:$0xff pattern:$0x73625140]
        %1376 = vst [vmem:[%s1367] ss:$4 sm:$0xff] %v1293
        %v1377 = vld.sshfl [vmem:[#allocation1 + $0x20] sm:$0xff pattern:$0x73625140]
        %1380 = vst [vmem:[#allocation1] ss:$4 sm:$0xff] %v1294
        %v1381 = vld.sshfl [vmem:[#allocation1] sm:$0xff pattern:$0x73625140]
        %1384 = vst [vmem:[%s1367] ss:$4 sm:$0xff] %v1295
        %v1385 = vld.sshfl [vmem:[#allocation1 + $0x20] sm:$0xff pattern:$0x73625140]
        %1388 = vst [vmem:[#allocation1] ss:$4 sm:$0xff] %v1296
        %v1389 = vld.sshfl [vmem:[#allocation1] sm:$0xff pattern:$0x73625140]
        %1392 = vst [vmem:[%s1367] ss:$4 sm:$0xff] %v1297
        %v1393 = vld.sshfl [vmem:[#allocation1 + $0x20] sm:$0xff pattern:$0x73625140]
        %v1395 = vunpack.c.l.b16 %v1364
        %v1396 = vunpack.c.l.b16 %v1369
        %v1397 = vunpack.c.l.b16 %v1373
        %v1398 = vunpack.c.l.b16 %v1377
        %v1399 = vunpack.c.l.b16 %v1381
        %v1400 = vunpack.c.l.b16 %v1385
        %v1401 = vunpack.c.l.b16 %v1389
        %v1402 = vunpack.c.l.b16 %v1393
        %v1403 = vrot.slane %v1395, 3
        %v1404 = vrot.slane %v1396, 2
        %v1405 = vsel %vm316, %v1404, %v1403
        %v1406 = vrot.slane %v1397, 1
        %v1407 = vsel %vm319, %v1406, %v1405
        %v1408 = vsel %vm322, %v1398, %v1407
        %v1409 = vrot.slane %v1399, 7
        %v1410 = vsel %vm325, %v1409, %v1408
        %v1411 = vrot.slane %v1400, 6
        %v1412 = vsel %vm328, %v1411, %v1410
        %v1413 = vrot.slane %v1401, 5
        %v1414 = vsel %vm331, %v1413, %v1412
        %v1415 = vrot.slane %v1402, 4
        %v1416 = vsel %vm334, %v1415, %v1414
        %v1417 = vpack.c.b16 %v1416, %v1416
        %v1419 = vsel %vm393, %v1361, 0
        %v1422 = vsel %vm393, %v1417, 0
        %1424 = vmatpush.bf16.xpose.msra.mxu0 0
        %1425 = vmatpush.bf16.xpose.msra.mxu0 0
        %1426 = vmatpush.bf16.xpose.msra.mxu0 0
        %1427 = vmatpush.bf16.xpose.msra.mxu0 0
        %1428 = vmatpush.bf16.xpose.msra.mxu0 0
        %1429 = vmatpush.bf16.xpose.msra.mxu0 0
        %1430 = vmatpush.bf16.xpose.msra.mxu0 0
        %1431 = vmatpush.bf16.xpose.msra.mxu0 %v1422
        %1432 = vmatmul.bf16.gmra.mxu0 %v1419
        %v1433 = vpop.f32.mrf.mxu0
        %v1434 = vadd.f32 0.0, %v1433
        %v1435 = vpop.f32.mrf.mxu0
        %1436 = vdwg.mxu0
        %v1437 = vsel %vm393, %v1434, -inf
        %1438 = vmax.xlane.f32.xlu0 %v1437
        %v1439 = vpop.xlane.xlu0 %1438
        %v1440 = vsub.f32 %v1434, %v1439
        %v1441 = vmul.f32 %v1440, 1.442695
        %v1442 = vpow.pop %v1441
        %v1443 = vsel %vm393, %v1442, 0.0
        %1444 = vadd.xlane.f32.xlu0 %v1443
        %v1445 = vpop.xlane.xlu0 %1444
        %v1446 = vpack.c.bf16 %v1442, %v1442
        %1448 = vst [vmem:[#allocation1] ss:$4 sm:$0xff] %v1298
        %v1449 = vld.sshfl [vmem:[#allocation1] sm:$0xff pattern:$0x73625140]
        %s1452 = scalar_lea.vmem [#allocation1], 32
        %1453 = vst [vmem:[%s1452] ss:$4 sm:$0xff] %v1299
        %v1454 = vld.sshfl [vmem:[#allocation1 + $0x20] sm:$0xff pattern:$0x73625140]
        %1457 = vst [vmem:[#allocation1] ss:$4 sm:$0xff] %v1300
        %v1458 = vld.sshfl [vmem:[#allocation1] sm:$0xff pattern:$0x73625140]
        %1461 = vst [vmem:[%s1452] ss:$4 sm:$0xff] %v1301
        %v1462 = vld.sshfl [vmem:[#allocation1 + $0x20] sm:$0xff pattern:$0x73625140]
        %1465 = vst [vmem:[#allocation1] ss:$4 sm:$0xff] %v1302
        %v1466 = vld.sshfl [vmem:[#allocation1] sm:$0xff pattern:$0x73625140]
        %1469 = vst [vmem:[%s1452] ss:$4 sm:$0xff] %v1303
        %v1470 = vld.sshfl [vmem:[#allocation1 + $0x20] sm:$0xff pattern:$0x73625140]
        %1473 = vst [vmem:[#allocation1] ss:$4 sm:$0xff] %v1304
        %v1474 = vld.sshfl [vmem:[#allocation1] sm:$0xff pattern:$0x73625140]
        %1477 = vst [vmem:[%s1452] ss:$4 sm:$0xff] %v1305
        %v1478 = vld.sshfl [vmem:[#allocation1 + $0x20] sm:$0xff pattern:$0x73625140]
        %v1480 = vunpack.c.l.b16 %v1449
        %v1481 = vunpack.c.l.b16 %v1454
        %v1482 = vunpack.c.l.b16 %v1458
        %v1483 = vunpack.c.l.b16 %v1462
        %v1484 = vunpack.c.l.b16 %v1466
        %v1485 = vunpack.c.l.b16 %v1470
        %v1486 = vunpack.c.l.b16 %v1474
        %v1487 = vunpack.c.l.b16 %v1478
        %v1488 = vrot.slane %v1480, 3
        %v1489 = vrot.slane %v1481, 2
        %v1490 = vsel %vm316, %v1489, %v1488
        %v1491 = vrot.slane %v1482, 1
        %v1492 = vsel %vm319, %v1491, %v1490
        %v1493 = vsel %vm322, %v1483, %v1492
        %v1494 = vrot.slane %v1484, 7
        %v1495 = vsel %vm325, %v1494, %v1493
        %v1496 = vrot.slane %v1485, 6
        %v1497 = vsel %vm328, %v1496, %v1495
        %v1498 = vrot.slane %v1486, 5
        %v1499 = vsel %vm331, %v1498, %v1497
        %v1500 = vrot.slane %v1487, 4
        %v1501 = vsel %vm334, %v1500, %v1499
        %v1502 = vpack.c.b16 %v1501, %v1501
        %v1504 = vsel %vm393, %v1446, 0
        %v1507 = vsel %vm482, %v1502, 0
        %1509 = vmatpush.bf16.msra.mxu0 0
        %1510 = vmatpush.bf16.msra.mxu0 0
        %1511 = vmatpush.bf16.msra.mxu0 0
        %1512 = vmatpush.bf16.msra.mxu0 0
        %1513 = vmatpush.bf16.msra.mxu0 0
        %1514 = vmatpush.bf16.msra.mxu0 0
        %1515 = vmatpush.bf16.msra.mxu0 0
        %1516 = vmatpush.bf16.msra.mxu0 %v1507
        %1517 = vmatmul.bf16.gmra.mxu0 %v1504
        %v1518 = vpop.f32.mrf.mxu0
        %v1519 = vadd.f32 0.0, %v1518
        %v1520 = vpop.f32.mrf.mxu0
        %1521 = vdwg.mxu0
        %v1522 = vrcp.pop %v1445
        %v1523 = vmul.f32 %v1519, %v1522
        %v1524 = vpack.c.bf16 %v1523, %v1523
        %v1526 = vrot.slane %v1524, 3
        %v1529 = vsel %vm504, %v1524, %v1526
        %v1531 = vsel %vm316, %v1524, %v1526
        %v1533 = vrot.slane %v1531, 1
        %v1534 = vsel %vm319, %v1524, %v1526
        %v1536 = vrot.slane %v1534, 2
        %v1537 = vsel %vm322, %v1524, %v1526
        %v1539 = vrot.slane %v1537, 3
        %v1540 = vunpack.i.l.s16 %v1529
        %v1541 = vunpack.i.h.s16 %v1529
        %v1542 = vunpack.i.l.s16 %v1533
        %v1543 = vunpack.i.h.s16 %v1533
        %v1544 = vunpack.i.l.s16 %v1536
        %v1545 = vunpack.i.h.s16 %v1536
        %v1546 = vunpack.i.l.s16 %v1539
        %v1547 = vunpack.i.h.s16 %v1539
        %v1548 = vpack.i.b16 %v1540, %v1540
        %v1549 = vpack.i.b16 %v1541, %v1541
        %v1550 = vpack.i.b16 %v1542, %v1542
        %v1551 = vpack.i.b16 %v1543, %v1543
        %v1552 = vpack.i.b16 %v1544, %v1544
        %v1553 = vpack.i.b16 %v1545, %v1545
        %v1554 = vpack.i.b16 %v1546, %v1546
        %v1555 = vpack.i.b16 %v1547, %v1547
        %v1557 = vunpack.c.l.s4 857870592
        %v1558 = vunpack.c.0.s8 %v1557
        %v1559 = vperm.slane %v1548, %v1558
        %v1561 = vunpack.c.l.s4 857870592
        %v1562 = vunpack.c.0.s8 %v1561
        %v1563 = vperm.slane %v1549, %v1562
        %v1565 = vunpack.c.l.s4 857870592
        %v1566 = vunpack.c.0.s8 %v1565
        %v1567 = vperm.slane %v1550, %v1566
        %v1569 = vunpack.c.l.s4 857870592
        %v1570 = vunpack.c.0.s8 %v1569
        %v1571 = vperm.slane %v1551, %v1570
        %v1573 = vunpack.c.l.s4 857870592
        %v1574 = vunpack.c.0.s8 %v1573
        %v1575 = vperm.slane %v1552, %v1574
        %v1577 = vunpack.c.l.s4 857870592
        %v1578 = vunpack.c.0.s8 %v1577
        %v1579 = vperm.slane %v1553, %v1578
        %v1581 = vunpack.c.l.s4 857870592
        %v1582 = vunpack.c.0.s8 %v1581
        %v1583 = vperm.slane %v1554, %v1582
        %v1585 = vunpack.c.l.s4 857870592
        %v1586 = vunpack.c.0.s8 %v1585
        %v1587 = vperm.slane %v1555, %v1586
        %vm1596 = vsmask.f32 7942
        %vm1597 = vmand %vm1255, %vm1596
        %v1598 = vld [vmem:[%s246] sm:$0x2]
        %v1599 = vsel %vm1597, %v1559, %v1598
        %1600 = vst [vmem:[%s246] sm:$0x2] %v1599
        %v1601 = vld [vmem:[%s246 + $0x2] sm:$0x2]
        %v1602 = vsel %vm1597, %v1563, %v1601
        %1603 = vst [vmem:[%s246 + $0x2] sm:$0x2] %v1602
        %v1604 = vld [vmem:[%s246 + $0x4] sm:$0x2]
        %v1605 = vsel %vm1597, %v1567, %v1604
        %1606 = vst [vmem:[%s246 + $0x4] sm:$0x2] %v1605
        %v1607 = vld [vmem:[%s246 + $0x6] sm:$0x2]
        %v1608 = vsel %vm1597, %v1571, %v1607
        %1609 = vst [vmem:[%s246 + $0x6] sm:$0x2] %v1608
        %v1610 = vld [vmem:[%s246 + $0x8] sm:$0x2]
        %v1611 = vsel %vm1597, %v1575, %v1610
        %1612 = vst [vmem:[%s246 + $0x8] sm:$0x2] %v1611
        %v1613 = vld [vmem:[%s246 + $0xa] sm:$0x2]
        %v1614 = vsel %vm1597, %v1579, %v1613
        %1615 = vst [vmem:[%s246 + $0xa] sm:$0x2] %v1614
        %v1616 = vld [vmem:[%s246 + $0xc] sm:$0x2]
        %v1617 = vsel %vm1597, %v1583, %v1616
        %1618 = vst [vmem:[%s246 + $0xc] sm:$0x2] %v1617
        %v1619 = vld [vmem:[%s246 + $0xe] sm:$0x2]
        %v1620 = vsel %vm1597, %v1587, %v1619
        %1621 = vst [vmem:[%s246 + $0xe] sm:$0x2] %v1620
        %s1622 = sand.u32 %s46, 1
        %s1623 = sand.u32 %s46, 1
        %s1624 = smul.addr %s1623, 16
        %s1625 = scalar_lea.vmem [#allocation3], %s1624
        // Predicated region
        $region66: #{transformer_sentence_encoder_layer_forward.5} parent=60 // pred_check
          %p1626 = pneg %p56
        $region67: #{transformer_sentence_encoder_layer_forward.5} parent=60 // pred_check_branch
          %1628 = sbr.rel (%p1626) target = $region69
        $region68: #{transformer_sentence_encoder_layer_forward.5} parent=60 // pred_region
          %s1629 = smul.addr %s12, 2
          %s1630 = scalar_lea.vmem %s1, %s1629
          // Predicated region
          $region70: #{transformer_sentence_encoder_layer_forward.5} parent=68 // pred_check
            _
          $region71: #{transformer_sentence_encoder_layer_forward.5} parent=68 // pred_check_branch
            %1632 = sbr.rel (0) target = $region73
          $region72: #{transformer_sentence_encoder_layer_forward.5} parent=68 // pred_region
            // Predicated region
            $region74: #{transformer_sentence_encoder_layer_forward.5} parent=72 // pred_check
              _
            $region75: #{transformer_sentence_encoder_layer_forward.5} parent=72 // pred_check_branch
              %1634 = sbr.rel target = $region77
            $region76: #{transformer_sentence_encoder_layer_forward.5} parent=72 // pred_region
              // Predicated region
              $region89: #{transformer_sentence_encoder_layer_forward.5} parent=76 // pred_check
                _
              $region90: #{transformer_sentence_encoder_layer_forward.5} parent=76 // pred_check_branch
                %1664 = sbr.rel (0) target = $region92
              $region91: #{transformer_sentence_encoder_layer_forward.5} parent=76 // pred_region
                loop: start=0, step=1, limit=1
                $region93: #{transformer_sentence_encoder_layer_forward.5} parent=91 // loop_pre_header
                  _
                $region94: #{transformer_sentence_encoder_layer_forward.5} parent=91 // loop_header
                  %s1666 = sphi 0, %s1670
                  %p1667 = scmp.ge.s32.totalorder %s1666, 1
                  %s1671 = sphi %s1625, %s1625
                  %s1672 = sphi %s1630, %s1630
                $region95: #{transformer_sentence_encoder_layer_forward.5} parent=91 // loop_header_branch
                  %1669 = sbr.rel (%p1667) target = $region99
                $region96: #{transformer_sentence_encoder_layer_forward.5} parent=91 // loop_body
                  _
                $region97: #{transformer_sentence_encoder_layer_forward.5} parent=91 // loop_footer
                  %s1670 = sadd.s32 1, %s1666
                $region98: #{transformer_sentence_encoder_layer_forward.5} parent=91 // loop_footer_branch
                  %1665 = sbr.rel target = $region94
                $region99: #{transformer_sentence_encoder_layer_forward.5} parent=91 // loop_exit
                  _
                %s1674 = ssub.s32 4, 1
                loop: start=0, step=1, limit=1
                $region100: #{transformer_sentence_encoder_layer_forward.5} parent=91 // loop_pre_header
                  _
                $region101: #{transformer_sentence_encoder_layer_forward.5} parent=91 // loop_header
                  %s1676 = sphi 0, %s1680
                  %p1677 = scmp.ge.s32.totalorder %s1676, 1
                  %s1681 = sphi %s1625, %s1625
                  %s1682 = sphi %s1630, %s1630
                $region102: #{transformer_sentence_encoder_layer_forward.5} parent=91 // loop_header_branch
                  %1679 = sbr.rel (%p1677) target = $region106
                $region103: #{transformer_sentence_encoder_layer_forward.5} parent=91 // loop_body
                  %v1683 = vld [vmem:[%s1681] sm:%s1674]
                  %1684 = vst [vmem:[%s1682] sm:%s1674] %v1683
                  %v1685 = vld [vmem:[%s1681 + $0x2] sm:%s1674]
                  %1686 = vst [vmem:[%s1682 + $0x4] sm:%s1674] %v1685
                  %v1687 = vld [vmem:[%s1681 + $0x4] sm:%s1674]
                  %1688 = vst [vmem:[%s1682 + $0x8] sm:%s1674] %v1687
                  %v1689 = vld [vmem:[%s1681 + $0x6] sm:%s1674]
                  %1690 = vst [vmem:[%s1682 + $0xc] sm:%s1674] %v1689
                  %v1691 = vld [vmem:[%s1681 + $0x8] sm:%s1674]
                  %1692 = vst [vmem:[%s1682 + $0x10] sm:%s1674] %v1691
                  %v1693 = vld [vmem:[%s1681 + $0xa] sm:%s1674]
                  %1694 = vst [vmem:[%s1682 + $0x14] sm:%s1674] %v1693
                  %v1695 = vld [vmem:[%s1681 + $0xc] sm:%s1674]
                  %1696 = vst [vmem:[%s1682 + $0x18] sm:%s1674] %v1695
                  %v1697 = vld [vmem:[%s1681 + $0xe] sm:%s1674]
                  %1698 = vst [vmem:[%s1682 + $0x1c] sm:%s1674] %v1697
                $region104: #{transformer_sentence_encoder_layer_forward.5} parent=91 // loop_footer
                  %s1680 = sadd.s32 1, %s1676
                $region105: #{transformer_sentence_encoder_layer_forward.5} parent=91 // loop_footer_branch
                  %1675 = sbr.rel target = $region101
                $region106: #{transformer_sentence_encoder_layer_forward.5} parent=91 // loop_exit
                  _
              $region92: #{transformer_sentence_encoder_layer_forward.5} parent=76 // pred_fallthru
                _
            $region77: #{transformer_sentence_encoder_layer_forward.5} parent=72 // pred_fallthru
              _
            // Predicated region
            $region78: #{transformer_sentence_encoder_layer_forward.5} parent=72 // pred_check
              _
            $region79: #{transformer_sentence_encoder_layer_forward.5} parent=72 // pred_check_branch
              %1636 = sbr.rel (0) target = $region81
            $region80: #{transformer_sentence_encoder_layer_forward.5} parent=72 // pred_region
              %s1638 = ssub.s32 4, 1
              loop: start=0, step=1, limit=1
              $region82: #{transformer_sentence_encoder_layer_forward.5} parent=80 // loop_pre_header
                _
              $region83: #{transformer_sentence_encoder_layer_forward.5} parent=80 // loop_header
                %s1640 = sphi 0, %s1644
                %p1641 = scmp.ge.s32.totalorder %s1640, 1
                %s1645 = sphi %s1625, %s1625
                %s1646 = sphi %s1630, %s1630
              $region84: #{transformer_sentence_encoder_layer_forward.5} parent=80 // loop_header_branch
                %1643 = sbr.rel (%p1641) target = $region88
              $region85: #{transformer_sentence_encoder_layer_forward.5} parent=80 // loop_body
                %v1647 = vld [vmem:[%s1645] sm:%s1638]
                %1648 = vst [vmem:[%s1646] sm:%s1638] %v1647
                %v1649 = vld [vmem:[%s1645 + $0x2] sm:%s1638]
                %1650 = vst [vmem:[%s1646 + $0x4] sm:%s1638] %v1649
                %v1651 = vld [vmem:[%s1645 + $0x4] sm:%s1638]
                %1652 = vst [vmem:[%s1646 + $0x8] sm:%s1638] %v1651
                %v1653 = vld [vmem:[%s1645 + $0x6] sm:%s1638]
                %1654 = vst [vmem:[%s1646 + $0xc] sm:%s1638] %v1653
                %v1655 = vld [vmem:[%s1645 + $0x8] sm:%s1638]
                %1656 = vst [vmem:[%s1646 + $0x10] sm:%s1638] %v1655
                %v1657 = vld [vmem:[%s1645 + $0xa] sm:%s1638]
                %1658 = vst [vmem:[%s1646 + $0x14] sm:%s1638] %v1657
                %v1659 = vld [vmem:[%s1645 + $0xc] sm:%s1638]
                %1660 = vst [vmem:[%s1646 + $0x18] sm:%s1638] %v1659
                %v1661 = vld [vmem:[%s1645 + $0xe] sm:%s1638]
                %1662 = vst [vmem:[%s1646 + $0x1c] sm:%s1638] %v1661
              $region86: #{transformer_sentence_encoder_layer_forward.5} parent=80 // loop_footer
                %s1644 = sadd.s32 1, %s1640
              $region87: #{transformer_sentence_encoder_layer_forward.5} parent=80 // loop_footer_branch
                %1639 = sbr.rel target = $region83
              $region88: #{transformer_sentence_encoder_layer_forward.5} parent=80 // loop_exit
                _
            $region81: #{transformer_sentence_encoder_layer_forward.5} parent=72 // pred_fallthru
              _
          $region73: #{transformer_sentence_encoder_layer_forward.5} parent=68 // pred_fallthru
            _
          %1699 = vnop
        $region69: #{transformer_sentence_encoder_layer_forward.5} parent=60 // pred_fallthru
          _
      $region61: #{transformer_sentence_encoder_layer_forward.5} parent=5 // pred_fallthru
        _
      %p1700 = scmp.le.s32.totalorder 2, %s7
      // Predicated region
      $region107: #{transformer_sentence_encoder_layer_forward.5} parent=5 // pred_check
        %p1701 = pneg %p1700
      $region108: #{transformer_sentence_encoder_layer_forward.5} parent=5 // pred_check_branch
        %1703 = sbr.rel (%p1701) target = $region110
      $region109: #{transformer_sentence_encoder_layer_forward.5} parent=5 // pred_region
        %s1704 = ssub.s32 %s7, 2
        // Predicated region
        $region111: #{transformer_sentence_encoder_layer_forward.5} parent=109 // pred_check
          %p1705 = pneg %p62
        $region112: #{transformer_sentence_encoder_layer_forward.5} parent=109 // pred_check_branch
          %1707 = sbr.rel (%p1705) target = $region114
        $region113: #{transformer_sentence_encoder_layer_forward.5} parent=109 // pred_region
          %s1708 = sand.u32 %s47, 1
          %s1709 = sand.u32 %s47, 1
          %s1710 = smul.addr %s1709, 16
          %s1711 = scalar_lea.vmem [#allocation3], %s1710
        $region114: #{transformer_sentence_encoder_layer_forward.5} parent=109 // pred_fallthru
          _
      $region110: #{transformer_sentence_encoder_layer_forward.5} parent=5 // pred_fallthru
        _
    $region6: #{transformer_sentence_encoder_layer_forward.5} parent=1 // loop_footer
      %s11 = sadd.s32 1, %s7
    $region7: #{transformer_sentence_encoder_layer_forward.5} parent=1 // loop_footer_branch
      %6 = sbr.rel target = $region3
    $region8: #{transformer_sentence_encoder_layer_forward.5} parent=1 // loop_exit
      _

</llo_original>
